<compile_context>
chip_gen: v7x
topology: tpu7x:2x2x1
jax: 0.10.0
libtpu: 0.0.40
codegen_flags: <defaults>
</compile_context>

<pallas_src>
import functools

import numpy as np
import jax
import jax.numpy as jnp
from jax.experimental import pallas as pl
from jax.experimental.pallas import tpu as pltpu


def _round_up(x, m):
    return ((x + m - 1) // m) * m


# ----------------------------------------------------------------------------
# Pallas kernel: B planes (Hi, Wi) -> (Ho, Wo), out[b] = Rh @ x[b] @ Rw^T.
# Both passes are single flat MXU matmuls; per-plane transposes ride the XLU.
# `height_first` is a static (trace-time) flag chosen by FLOPs in the wrapper.
# ----------------------------------------------------------------------------
def _resize_kernel(x_ref, rhT_ref, rwT_ref, o_ref, *, height_first):
    B, Hi, Wi = x_ref.shape
    Ho = rhT_ref.shape[1]
    Wo = rwT_ref.shape[1]
    cdt = x_ref.dtype                      # operand dtype (f32 or bf16)
    x = x_ref[...]

    if height_first:
        # Height pass: (B,Hi,Wi) -> (B,Wi,Hi) -> (B*Wi,Hi) @ (Hi,Ho)
        xt = jnp.swapaxes(x, 1, 2).reshape(B * Wi, Hi)
        y = jnp.dot(xt, rhT_ref[...],
                    preferred_element_type=jnp.float32).astype(cdt)
        y = jnp.swapaxes(y.reshape(B, Wi, Ho), 1, 2)        # (B, Ho, Wi)
        # Width pass: (B*Ho,Wi) @ (Wi,Wo)
        out = jnp.dot(y.reshape(B * Ho, Wi), rwT_ref[...],
                      preferred_element_type=jnp.float32).reshape(B, Ho, Wo)
    else:
        # Width pass: (B*Hi,Wi) @ (Wi,Wo)
        z = jnp.dot(x.reshape(B * Hi, Wi), rwT_ref[...],
                    preferred_element_type=jnp.float32).astype(cdt)
        # Height pass: (B,Hi,Wo) -> (B,Wo,Hi) -> (B*Wo,Hi) @ (Hi,Ho)
        zt = jnp.swapaxes(z.reshape(B, Hi, Wo), 1, 2).reshape(B * Wo, Hi)
        y = jnp.dot(zt, rhT_ref[...], preferred_element_type=jnp.float32)
        out = jnp.swapaxes(y.reshape(B, Wo, Ho), 1, 2)       # (B, Ho, Wo)

    o_ref[...] = out.astype(o_ref.dtype)


# ----------------------------------------------------------------------------
# VMEM / plane-batch planning
# ----------------------------------------------------------------------------
def _vmem_plan():
    """(per-step working-set budget, vmem_limit_bytes), generation aware."""
    vmem_bytes = None
    try:
        info = pltpu.get_tpu_info()
        vmem_bytes = getattr(info, "vmem_capacity_bytes", None)
    except Exception:
        vmem_bytes = None
    if vmem_bytes is None:
        vmem_bytes = 64 * 1024 * 1024              # conservative: v7x per-TC
    if vmem_bytes >= 96 * 1024 * 1024:             # v5e / v6e: 128 MiB VMEM
        return 24 * 1024 * 1024, 64 * 1024 * 1024
    return 12 * 1024 * 1024, 48 * 1024 * 1024      # v7x: 64 MiB per TensorCore


def _max_planes_for_budget(hi_p, wi_p, ho_p, wo_p, height_first, budget, isz):
    """Largest power-of-two plane count whose full per-step working set fits.

    Accounts for: pipelined (x2) input & output blocks, the transposed input
    copy, the pass-1 result (+ its cast/transposed copy) and the pre-store
    value, plus the (assumed double-buffered) weight operands.
    """
    mid = ho_p * wi_p if height_first else hi_p * wo_p
    per_plane = (3 * hi_p * wi_p * isz      # input block x2 + transposed copy
                 + mid * (4 + isz)          # pass-1 result (f32) + cast/transpose
                 + 3 * ho_p * wo_p * 4)     # f32 output block x2 + pre-store value
    fixed = 2 * (hi_p * ho_p + wi_p * wo_p) * isz
    b = max(1, (budget - fixed) // max(per_plane, 1))
    return 1 << max(0, int(b).bit_length() - 1)


def _largest_divisor_at_most(n, cap):
    cap = max(1, min(int(cap), int(n)))
    for b in range(cap, 0, -1):
        if n % b == 0:
            return b
    return 1


# ----------------------------------------------------------------------------
# Wrapper: padding (only when needed), pass-order choice, pallas_call
# ----------------------------------------------------------------------------
_WEIGHT_SINGLE_BUFFER_OK = [True]   # flipped off once if Buffered(1) is rejected


def pallas_separable_resize(x, rh, rw, use_bf16=False):
    """x: (N, C, Hi, Wi); rh: (Ho, Hi); rw: (Wo, Wi)  ->  (N, C, Ho, Wo) f32."""
    cdt = jnp.bfloat16 if use_bf16 else jnp.float32
    isz = 2 if use_bf16 else 4
    x = jnp.asarray(x, cdt)
    rh = np.asarray(rh, np.float32)
    rw = np.asarray(rw, np.float32)

    N, C, Hi, Wi = x.shape
    Ho, Wo = rh.shape[0], rw.shape[0]
    nc = N * C

    # Lane/sublane friendly padding.  Ho is bucketed coarsely (64) so random
    # ratios map onto a handful of compiled shapes.  Zero-padded weight
    # rows/cols keep the linear map exact; padding is sliced off afterwards.
    h_align = 16 if use_bf16 else 8
    Hi_p, Wi_p = _round_up(Hi, h_align), _round_up(Wi, 128)
    Ho_p, Wo_p = _round_up(Ho, 64), _round_up(Wo, 128)

    # Pass order by FLOPs: contract the shrinking dimension first.
    flops_wfirst = Hi_p * Wo_p * (Wi_p + Ho_p)
    flops_hfirst = Ho_p * Wi_p * (Hi_p + Wo_p)
    height_first = flops_hfirst < flops_wfirst

    budget, vmem_limit = _vmem_plan()
    b_budget = _max_planes_for_budget(Hi_p, Wi_p, Ho_p, Wo_p, height_first,
                                      budget, isz)
    b_cap = min(b_budget, max(1, nc // 2))   # grid >= 2 so v7x can use both TCs
    B = _largest_divisor_at_most(nc, b_cap)  # divisor of nc -> no plane padding

    xf = x.reshape(nc, Hi, Wi)
    if (Hi_p, Wi_p) != (Hi, Wi):             # skip the pad round-trip if aligned
        xf = jnp.pad(xf, ((0, 0), (0, Hi_p - Hi), (0, Wi_p - Wi)))

    rhT_p = np.zeros((Hi_p, Ho_p), np.float32)
    rhT_p[:Hi, :Ho] = rh.T
    rwT_p = np.zeros((Wi_p, Wo_p), np.float32)
    rwT_p[:Wi, :Wo] = rw.T
    rhT_dev = jnp.asarray(rhT_p, cdt)
    rwT_dev = jnp.asarray(rwT_p, cdt)

    per_plane_flops = (2 * Ho_p * Wi_p * (Hi_p + Wo_p) if height_first
                       else 2 * Hi_p * Wo_p * (Wi_p + Ho_p))
    cost = pl.CostEstimate(
        flops=nc * per_plane_flops,
        transcendentals=0,
        bytes_accessed=(nc * Hi_p * Wi_p * isz + nc * Ho_p * Wo_p * 4
                        + (rhT_p.size + rwT_p.size) * isz))

    def run(single_buffer_weights):
        if single_buffer_weights:
            # Grid-invariant operands: one pipeline buffer is enough.
            w_specs = [pl.BlockSpec((Hi_p, Ho_p), lambda b: (0, 0),
                                    pipeline_mode=pl.Buffered(1)),
                       pl.BlockSpec((Wi_p, Wo_p), lambda b: (0, 0),
                                    pipeline_mode=pl.Buffered(1))]
        else:
            w_specs = [pl.BlockSpec((Hi_p, Ho_p), lambda b: (0, 0)),
                       pl.BlockSpec((Wi_p, Wo_p), lambda b: (0, 0))]
        return pl.pallas_call(
            functools.partial(_resize_kernel, height_first=height_first),
            out_shape=jax.ShapeDtypeStruct((nc, Ho_p, Wo_p), jnp.float32),
            grid_spec=pltpu.PrefetchScalarGridSpec(
                num_scalar_prefetch=0,
                grid=(nc // B,),
                in_specs=[pl.BlockSpec((B, Hi_p, Wi_p),
                                       lambda b: (b, 0, 0))] + w_specs,
                out_specs=pl.BlockSpec((B, Ho_p, Wo_p), lambda b: (b, 0, 0)),
            ),
            compiler_params=pltpu.CompilerParams(
                dimension_semantics=("parallel",),   # shards across TCs on v7x
                vmem_limit_bytes=vmem_limit,
            ),
            cost_estimate=cost,
        )(xf, rhT_dev, rwT_dev)

    if _WEIGHT_SINGLE_BUFFER_OK[0]:
        try:
            out = run(True)
        except Exception:                 # backend rejected Buffered(1): cache & retry
            _WEIGHT_SINGLE_BUFFER_OK[0] = False
            out = run(False)
    else:
        out = run(False)

    if (Ho_p, Wo_p) != (Ho, Wo):
        out = out[:, :Ho, :Wo]
    return out.reshape(N, C, Ho, Wo)


# ----------------------------------------------------------------------------
# Interpolation weight matrices (match PyTorch F.interpolate semantics)
# ----------------------------------------------------------------------------
def bilinear_weight_matrix(out_size, in_size):
    # mode='bilinear', align_corners=False, antialias=False (PyTorch defaults)
    scale = in_size / out_size
    dst = np.arange(out_size, dtype=np.float64)
    src = (dst + 0.5) * scale - 0.5
    src = np.maximum(src, 0.0)
    i0 = np.floor(src).astype(np.int64)
    i0 = np.minimum(i0, in_size - 1)
    i1 = np.minimum(i0 + 1, in_size - 1)
    lam = (src - i0).astype(np.float32)
    W = np.zeros((out_size, in_size), dtype=np.float32)
    rows = np.arange(out_size)
    np.add.at(W, (rows, i0), 1.0 - lam)
    np.add.at(W, (rows, i1), lam)
    return W


def nearest_weight_matrix(out_size, in_size):
    # PyTorch legacy 'nearest' (floor) — the default mode of F.interpolate.
    scale = in_size / out_size
    src = np.minimum(np.floor(np.arange(out_size) * scale).astype(np.int64),
                     in_size - 1)
    W = np.zeros((out_size, in_size), dtype=np.float32)
    W[np.arange(out_size), src] = 1.0
    return W


# ----------------------------------------------------------------------------
# RandomResize module (JAX / Pallas)
# ----------------------------------------------------------------------------
class RandomResize:
    """Resize image with random scale ratio (bilinear), Pallas-backed."""

    def __init__(self, min_ratio=0.5, max_ratio=2, target_size=0,
                 proportional=False, rng=None, use_bf16=False):
        self.proportional = proportional
        self.min_ratio = min_ratio
        self.max_ratio = max_ratio
        self.target_size = target_size
        self.use_bf16 = use_bf16
        # Host-side RNG mirrors np.random usage in the reference (the drawn
        # ratios decide output SHAPES, so they must stay on the host).
        self._rng = rng if rng is not None else np.random.default_rng(0)

    def random_ratio(self, resize_to_small_or_big):
        if resize_to_small_or_big == 0:
            ratio = self._rng.random() * (self.max_ratio - 1) + 1
        else:
            ratio = self._rng.random() * (1 - self.min_ratio) + self.min_ratio
        return ratio

    def forward(self, image_and_cover):
        image, cover_image = image_and_cover
        image_height = image.shape[2]
        image_width = image.shape[3]
        if self.proportional:
            resize_to_small_or_big = int(self._rng.integers(2))
            height_ratio = self.random_ratio(resize_to_small_or_big)
            width_ratio = height_ratio
        else:
            resize_to_small_or_big = int(self._rng.integers(2))
            height_ratio = self.random_ratio(resize_to_small_or_big)
            resize_to_small_or_big = int(self._rng.integers(2))
            width_ratio = self.random_ratio(resize_to_small_or_big)
        resize_height = int(height_ratio * image_height)
        resize_width = int(width_ratio * image_width)

        # Bilinear resize weights.
        rh = bilinear_weight_matrix(resize_height, image_height)
        rw = bilinear_weight_matrix(resize_width, image_width)

        if self.target_size != 0:
            # Compose bilinear + nearest (both linear maps) into one resize:
            # exact, one pallas_call, no intermediate HBM round-trip.
            rh = nearest_weight_matrix(self.target_size, resize_height) @ rh
            rw = nearest_weight_matrix(self.target_size, resize_width) @ rw

        return pallas_separable_resize(image, rh, rw, use_bf16=self.use_bf16)

    __call__ = forward


# ----------------------------------------------------------------------------
# Pure-JAX reference for sanity check
# ----------------------------------------------------------------------------
def _ref_resize(x, rh, rw):
    return jnp.einsum('oh,nchw,pw->ncop',
                      jnp.asarray(rh), jnp.asarray(x, jnp.float32),
                      jnp.asarray(rw))


if __name__ == "__main__":
    key = jax.random.PRNGKey(0)
    N, C, H, W = 2, 4, 16, 16
    image = jax.random.normal(key, (N, C, H, W), dtype=jnp.float32)
    cover = jnp.zeros_like(image)   # cover_image is unused by forward

    # Full module forward (random ratios + composed target-size pass).
    module = RandomResize(min_ratio=0.5, max_ratio=2, target_size=16,
                          proportional=False, rng=np.random.default_rng(0))
    out = jax.block_until_ready(module((image, cover)))
    assert out.shape == (N, C, 16, 16)

    # 1) Plain bilinear resize (width-first pass order) vs. pure-JAX reference.
    rh = bilinear_weight_matrix(24, H)
    rw = bilinear_weight_matrix(11, W)
    got = pallas_separable_resize(image, rh, rw)
    want = _ref_resize(image, rh, rw)
    np.testing.assert_allclose(np.asarray(got), np.asarray(want),
                               rtol=1e-5, atol=1e-5)

    # 2) Composed bilinear + nearest map (target_size) vs. reference.
    rh2 = nearest_weight_matrix(16, 24) @ rh
    rw2 = nearest_weight_matrix(16, 11) @ rw
    got2 = pallas_separable_resize(image, rh2, rw2)
    want2 = _ref_resize(image, rh2, rw2)
    np.testing.assert_allclose(np.asarray(got2), np.asarray(want2),
                               rtol=1e-5, atol=1e-5)

    # 3) Tall image with a height downscale — exercises the height-first order.
    tall = jax.random.normal(jax.random.PRNGKey(1), (1, 2, 128, 16),
                             dtype=jnp.float32)
    rh3 = bilinear_weight_matrix(64, 128)
    rw3 = bilinear_weight_matrix(16, 16)
    got3 = pallas_separable_resize(tall, rh3, rw3)
    want3 = _ref_resize(tall, rh3, rw3)
    np.testing.assert_allclose(np.asarray(got3), np.asarray(want3),
                               rtol=1e-5, atol=1e-5)

    # 4) Optional bf16-operand fast path (v6e/v7x), loose tolerance.
    got_bf16 = pallas_separable_resize(image, rh, rw, use_bf16=True)
    np.testing.assert_allclose(np.asarray(got_bf16), np.asarray(want),
                               rtol=0, atol=1e-1)

    print("KERNEL_OK")
</pallas_src>

<mosaic_0001>
module attributes {stable_mosaic.version = 11 : i64} {
  func.func @_resize_kernel(%arg0: i32, %arg1: memref<4x16x128xf32, #tpu.memory_space<vmem>>, %arg2: memref<16x64xf32, #tpu.memory_space<vmem>>, %arg3: memref<128x128xf32, #tpu.memory_space<vmem>>, %arg4: memref<4x64x128xf32, #tpu.memory_space<vmem>>) attributes {dimension_semantics = [#tpu.dimension_semantics<parallel>], iteration_bounds = array<i64: 2>, scalar_prefetch = 0 : i64, scratch_operands = 0 : i64, tpu.core_type = #tpu.core_type<tc>, window_params = [{transform_indices = @transform_0, window_bounds = array<i64: 4, 16, 128>}, {pipeline_mode = #tpu.pipeline_mode<synchronous>, transform_indices = @transform_1, window_bounds = array<i64: 16, 64>}, {pipeline_mode = #tpu.pipeline_mode<synchronous>, transform_indices = @transform_2, window_bounds = array<i64: 128, 128>}, {transform_indices = @transform_3, window_bounds = array<i64: 4, 64, 128>}]} {
    %c0 = arith.constant 0 : index
    %c0_0 = arith.constant 0 : index
    %c0_1 = arith.constant 0 : index
    %0 = vector.load %arg1[%c0, %c0_0, %c0_1] : memref<4x16x128xf32, #tpu.memory_space<vmem>>, vector<4x16x128xf32>
    %1 = vector.shape_cast %0 : vector<4x16x128xf32> to vector<64x128xf32>
    %c0_2 = arith.constant 0 : index
    %c0_3 = arith.constant 0 : index
    %2 = vector.load %arg3[%c0_2, %c0_3] : memref<128x128xf32, #tpu.memory_space<vmem>>, vector<128x128xf32>
    %cst = arith.constant dense<0.000000e+00> : vector<64x128xf32>
    %3 = tpu.matmul %1, %2, %cst {dimension_numbers = #tpu.dot_dimension_numbers<[1], [0], [0], [1], [0, 0, 1, 1], [], []>} : vector<64x128xf32>, vector<128x128xf32>, vector<64x128xf32> -> vector<64x128xf32>
    %4 = vector.shape_cast %3 : vector<64x128xf32> to vector<4x16x128xf32>
    %5 = tpu.transpose %4, [0, 2, 1] : vector<4x16x128xf32> -> vector<4x128x16xf32>
    %6 = vector.shape_cast %5 : vector<4x128x16xf32> to vector<512x16xf32>
    %c0_4 = arith.constant 0 : index
    %c0_5 = arith.constant 0 : index
    %7 = vector.load %arg2[%c0_4, %c0_5] : memref<16x64xf32, #tpu.memory_space<vmem>>, vector<16x64xf32>
    %cst_6 = arith.constant dense<0.000000e+00> : vector<512x64xf32>
    %8 = tpu.matmul %6, %7, %cst_6 {dimension_numbers = #tpu.dot_dimension_numbers<[1], [0], [0], [1], [0, 0, 1, 1], [], []>} : vector<512x16xf32>, vector<16x64xf32>, vector<512x64xf32> -> vector<512x64xf32>
    %9 = vector.shape_cast %8 : vector<512x64xf32> to vector<4x128x64xf32>
    %10 = tpu.transpose %9, [0, 2, 1] : vector<4x128x64xf32> -> vector<4x64x128xf32>
    %c0_7 = arith.constant 0 : index
    %c0_8 = arith.constant 0 : index
    %c0_9 = arith.constant 0 : index
    %11 = vector.load %arg4[%c0_7, %c0_8, %c0_9] : memref<4x64x128xf32, #tpu.memory_space<vmem>>, vector<4x64x128xf32>
    tpu.vector_store %arg4[%c0_7, %c0_8, %c0_9], %10 {strides = array<i32>} : memref<4x64x128xf32, #tpu.memory_space<vmem>>, vector<4x64x128xf32>,
    return
  }
  func.func @transform_0(%arg0: i32) -> (i32, i32, i32) {
    %c0_i32 = arith.constant 0 : i32
    %c0_i32_0 = arith.constant 0 : i32
    %c0_i32_1 = arith.constant 0 : i32
    return %arg0, %c0_i32, %c0_i32_0 : i32, i32, i32
  }
  func.func @transform_1(%arg0: i32) -> (i32, i32) {
    %c0_i32 = arith.constant 0 : i32
    %c0_i32_0 = arith.constant 0 : i32
    %c0_i32_1 = arith.constant 0 : i32
    return %c0_i32, %c0_i32_0 : i32, i32
  }
  func.func @transform_2(%arg0: i32) -> (i32, i32) {
    %c0_i32 = arith.constant 0 : i32
    %c0_i32_0 = arith.constant 0 : i32
    %c0_i32_1 = arith.constant 0 : i32
    return %c0_i32, %c0_i32_0 : i32, i32
  }
  func.func @transform_3(%arg0: i32) -> (i32, i32, i32) {
    %c0_i32 = arith.constant 0 : i32
    %c0_i32_0 = arith.constant 0 : i32
    %c0_i32_1 = arith.constant 0 : i32
    return %arg0, %c0_i32, %c0_i32_0 : i32, i32, i32
  }
}

module attributes {stable_mosaic.version = 11 : i64} {
  func.func @_resize_kernel(%arg0: i32, %arg1: memref<4x16x128xf32, #tpu.memory_space<vmem>>, %arg2: memref<16x64xf32, #tpu.memory_space<vmem>>, %arg3: memref<128x128xf32, #tpu.memory_space<vmem>>, %arg4: memref<4x64x128xf32, #tpu.memory_space<vmem>>) attributes {dimension_semantics = [#tpu.dimension_semantics<parallel>], iteration_bounds = array<i64: 2>, scalar_prefetch = 0 : i64, scratch_operands = 0 : i64, tpu.core_type = #tpu.core_type<tc>, window_params = [{transform_indices = @transform_0, window_bounds = array<i64: 4, 16, 128>}, {pipeline_mode = #tpu.pipeline_mode<synchronous>, transform_indices = @transform_1, window_bounds = array<i64: 16, 64>}, {pipeline_mode = #tpu.pipeline_mode<synchronous>, transform_indices = @transform_2, window_bounds = array<i64: 128, 128>}, {transform_indices = @transform_3, window_bounds = array<i64: 4, 64, 128>}]} {
    %c0 = arith.constant 0 : index
    %c0_0 = arith.constant 0 : index
    %c0_1 = arith.constant 0 : index
    %0 = vector.load %arg1[%c0, %c0_0, %c0_1] : memref<4x16x128xf32, #tpu.memory_space<vmem>>, vector<4x16x128xf32>
    %1 = vector.shape_cast %0 : vector<4x16x128xf32> to vector<64x128xf32>
    %c0_2 = arith.constant 0 : index
    %c0_3 = arith.constant 0 : index
    %2 = vector.load %arg3[%c0_2, %c0_3] : memref<128x128xf32, #tpu.memory_space<vmem>>, vector<128x128xf32>
    %cst = arith.constant dense<0.000000e+00> : vector<64x128xf32>
    %3 = tpu.matmul %1, %2, %cst {dimension_numbers = #tpu.dot_dimension_numbers<[1], [0], [0], [1], [0, 0, 1, 1], [], []>} : vector<64x128xf32>, vector<128x128xf32>, vector<64x128xf32> -> vector<64x128xf32>
    %4 = vector.shape_cast %3 : vector<64x128xf32> to vector<4x16x128xf32>
    %5 = tpu.transpose %4, [0, 2, 1] : vector<4x16x128xf32> -> vector<4x128x16xf32>
    %6 = vector.shape_cast %5 : vector<4x128x16xf32> to vector<512x16xf32>
    %c0_4 = arith.constant 0 : index
    %c0_5 = arith.constant 0 : index
    %7 = vector.load %arg2[%c0_4, %c0_5] : memref<16x64xf32, #tpu.memory_space<vmem>>, vector<16x64xf32>
    %cst_6 = arith.constant dense<0.000000e+00> : vector<512x64xf32>
    %8 = tpu.matmul %6, %7, %cst_6 {dimension_numbers = #tpu.dot_dimension_numbers<[1], [0], [0], [1], [0, 0, 1, 1], [], []>} : vector<512x16xf32>, vector<16x64xf32>, vector<512x64xf32> -> vector<512x64xf32>
    %9 = vector.shape_cast %8 : vector<512x64xf32> to vector<4x128x64xf32>
    %10 = tpu.transpose %9, [0, 2, 1] : vector<4x128x64xf32> -> vector<4x64x128xf32>
    %c0_7 = arith.constant 0 : index
    %c0_8 = arith.constant 0 : index
    %c0_9 = arith.constant 0 : index
    %11 = vector.load %arg4[%c0_7, %c0_8, %c0_9] : memref<4x64x128xf32, #tpu.memory_space<vmem>>, vector<4x64x128xf32>
    tpu.vector_store %arg4[%c0_7, %c0_8, %c0_9], %10 {strides = array<i32>} : memref<4x64x128xf32, #tpu.memory_space<vmem>>, vector<4x64x128xf32>,
    return
  }
  func.func @transform_0(%arg0: i32) -> (i32, i32, i32) {
    %c0_i32 = arith.constant 0 : i32
    %c0_i32_0 = arith.constant 0 : i32
    %c0_i32_1 = arith.constant 0 : i32
    return %arg0, %c0_i32, %c0_i32_0 : i32, i32, i32
  }
  func.func @transform_1(%arg0: i32) -> (i32, i32) {
    %c0_i32 = arith.constant 0 : i32
    %c0_i32_0 = arith.constant 0 : i32
    %c0_i32_1 = arith.constant 0 : i32
    return %c0_i32, %c0_i32_0 : i32, i32
  }
  func.func @transform_2(%arg0: i32) -> (i32, i32) {
    %c0_i32 = arith.constant 0 : i32
    %c0_i32_0 = arith.constant 0 : i32
    %c0_i32_1 = arith.constant 0 : i32
    return %c0_i32, %c0_i32_0 : i32, i32
  }
  func.func @transform_3(%arg0: i32) -> (i32, i32, i32) {
    %c0_i32 = arith.constant 0 : i32
    %c0_i32_0 = arith.constant 0 : i32
    %c0_i32_1 = arith.constant 0 : i32
    return %arg0, %c0_i32, %c0_i32_0 : i32, i32, i32
  }
}

</mosaic_0001>

<llo_original>
// kernel: tpu_custom_call.1
$region0: #{tpu_custom_call.1}
  #allocation0 [shape = 'u32[]', space=smem, size = 0x4, offset = 0x4, fixed_abs, tag = 'smem constant byte address 0x4 - core index']
  #allocation1 [shape = 'u32[144,128]{1,0:T(1,128)}', space=vmem, size = 0x12000, scoped, tag = 'internal scratch']
  %s0 = inlined_call_operand.hbm [shape: f32[8,16,128], index: 0, kind: input, shape index: {}]
  %s1 = inlined_call_operand.hbm [shape: f32[16,64], index: 1, kind: input, shape index: {}]
  %s2 = inlined_call_operand.hbm [shape: f32[128,128], index: 2, kind: input, shape index: {}]
  %s3 = inlined_call_operand.hbm [shape: f32[8,64,128], index: 3, kind: output, shape index: {}]
  %s4 = sld [smem:[#allocation0]]
  $region57: #{tpu_custom_call.1} parent=0
    _
  %s6 = ssub.s32 1, %s4
  %s7 = scalar_select 0, %s6, %s4
  $region1: #{tpu_custom_call.1} parent=0
    #allocation2 [shape = 'u8[65536]{0}', space=vmem, size = 0x10000, scoped, tag = 'input window, operand 0']
    #allocation3 [shape = 's32[2]{0}', space=sflag, size = 0x8, scoped, tag = 'scoped memory for tpu_custom_call.1']
    #allocation4 [shape = 's32[2]{0}', space=sflag, size = 0x8, scoped, tag = 'scoped memory for tpu_custom_call.1']
    #allocation5 [shape = 'u8[8192]{0}', space=vmem, size = 0x2000, scoped, tag = 'input window, operand 1, single buffered']
    #allocation6 [shape = 's32[1]{0}', space=sflag, size = 0x4, scoped, tag = 'scoped memory for tpu_custom_call.1']
    #allocation7 [shape = 'u8[65536]{0}', space=vmem, size = 0x10000, scoped, tag = 'input window, operand 2, single buffered']
    #allocation8 [shape = 'u8[262144]{0}', space=vmem, size = 0x40000, scoped, tag = 'output window, operand 0']
    %8 = vsyncpa [#allocation3], 0
    %s9 = scalar_lea.sflag [#allocation3], 1
    %10 = vsyncpa %s9, 0
    %11 = vsyncpa [#allocation6], 0
    %12 = vsyncpa [#allocation4], 0
    %s13 = scalar_lea.sflag [#allocation4], 1
    %14 = vsyncpa %s13, 0
    loop: start=0, step=1, limit=4
    $region2: #{tpu_custom_call.1} parent=1 // loop_pre_header
      _
    $region3: #{tpu_custom_call.1} parent=1 // loop_header
      %s16 = sphi 0, %s20
      %p17 = scmp.ge.s32.totalorder %s16, 4
      %s26 = sphi 0, %s28
      %s29 = sphi 0, %s26
      %s30 = sphi 0, %s29
      %s46 = sphi 0, %s30
      %s50 = sphi 0, %s50
      %s52 = sphi 0, %s50
      %s53 = sphi 0, %s52
      %s67 = sphi 0, %s53
      %s71 = sphi 0, %s71
      %s73 = sphi 0, %s71
      %s74 = sphi 0, %s73
      %s88 = sphi 0, %s74
      %s94 = sphi 0, %s96
      %s97 = sphi 0, %s94
      %s98 = sphi 0, %s97
      %s114 = sphi 0, %s98
    $region4: #{tpu_custom_call.1} parent=1 // loop_header_branch
      %19 = sbr.rel (%p17) target = $region8
    $region5: #{tpu_custom_call.1} parent=1 // loop_body
      %s21 = ssub.s32 %s16, 1
      %s22 = ssub.s32 %s16, 2
      %s23 = sadd.s32 %s16, 1
      %s24 = ssub.s32 %s16, %s23
      %p25 = scmp.eq.s32.totalorder %s24, 0
      %s27 = sadd.s32 %s26, 1
      %s28 = scalar_select %p25, %s26, %s27
      %p31 = pneg %p25
      %p32 = scmp.eq.s32.totalorder %s16, 1
      %p33 = por %p31, %p32
      %p34 = scmp.ne.s32.totalorder %s26, %s29
      %p35 = scmp.eq.s32.totalorder %s16, 0
      %p36 = por %p34, %p35
      %p37 = scmp.ne.s32.totalorder %s26, %s29
      %p38 = scmp.eq.s32.totalorder %s21, 1
      %p39 = por %p37, %p38
      %p40 = scmp.ne.s32.totalorder %s29, %s30
      %p41 = scmp.eq.s32.totalorder %s21, 0
      %p42 = por %p40, %p41
      %p43 = scmp.ne.s32.totalorder %s29, %s30
      %p44 = scmp.eq.s32.totalorder %s22, 1
      %p45 = por %p43, %p44
      %p47 = scmp.ne.s32.totalorder %s30, %s46
      %p48 = scmp.eq.s32.totalorder %s22, 0
      %p49 = por %p47, %p48
      %s51 = sadd.s32 %s50, 1
      %p54 = scmp.eq.s32.totalorder %s16, 1
      %p55 = scmp.ne.s32.totalorder %s50, %s52
      %p56 = scmp.eq.s32.totalorder %s16, 0
      %p57 = por %p55, %p56
      %p58 = scmp.ne.s32.totalorder %s50, %s52
      %p59 = scmp.eq.s32.totalorder %s21, 1
      %p60 = por %p58, %p59
      %p61 = scmp.ne.s32.totalorder %s52, %s53
      %p62 = scmp.eq.s32.totalorder %s21, 0
      %p63 = por %p61, %p62
      %p64 = scmp.ne.s32.totalorder %s52, %s53
      %p65 = scmp.eq.s32.totalorder %s22, 1
      %p66 = por %p64, %p65
      %p68 = scmp.ne.s32.totalorder %s53, %s67
      %p69 = scmp.eq.s32.totalorder %s22, 0
      %p70 = por %p68, %p69
      %s72 = sadd.s32 %s71, 1
      %p75 = scmp.eq.s32.totalorder %s16, 1
      %p76 = scmp.ne.s32.totalorder %s71, %s73
      %p77 = scmp.eq.s32.totalorder %s16, 0
      %p78 = por %p76, %p77
      %p79 = scmp.ne.s32.totalorder %s71, %s73
      %p80 = scmp.eq.s32.totalorder %s21, 1
      %p81 = por %p79, %p80
      %p82 = scmp.ne.s32.totalorder %s73, %s74
      %p83 = scmp.eq.s32.totalorder %s21, 0
      %p84 = por %p82, %p83
      %p85 = scmp.ne.s32.totalorder %s73, %s74
      %p86 = scmp.eq.s32.totalorder %s22, 1
      %p87 = por %p85, %p86
      %p89 = scmp.ne.s32.totalorder %s74, %s88
      %p90 = scmp.eq.s32.totalorder %s22, 0
      %p91 = por %p89, %p90
      %s92 = ssub.s32 %s16, %s23
      %p93 = scmp.eq.s32.totalorder %s92, 0
      %s95 = sadd.s32 %s94, 1
      %s96 = scalar_select %p93, %s94, %s95
      %p99 = pneg %p93
      %p100 = scmp.eq.s32.totalorder %s16, 1
      %p101 = por %p99, %p100
      %p102 = scmp.ne.s32.totalorder %s94, %s97
      %p103 = scmp.eq.s32.totalorder %s16, 0
      %p104 = por %p102, %p103
      %p105 = scmp.ne.s32.totalorder %s94, %s97
      %p106 = scmp.eq.s32.totalorder %s21, 1
      %p107 = por %p105, %p106
      %p108 = scmp.ne.s32.totalorder %s97, %s98
      %p109 = scmp.eq.s32.totalorder %s21, 0
      %p110 = por %p108, %p109
      %p111 = scmp.ne.s32.totalorder %s97, %s98
      %p112 = scmp.eq.s32.totalorder %s22, 1
      %p113 = por %p111, %p112
      %p115 = scmp.ne.s32.totalorder %s98, %s114
      %p116 = scmp.eq.s32.totalorder %s22, 0
      %p117 = por %p115, %p116
      %p118 = scmp.le.s32.totalorder 1, %s16
      %p119 = scmp.lt.s32.totalorder %s16, 3
      %p120 = pnand %p118, %p119
      %p121 = pneg %p120
      // Predicated region
      $region9: #{tpu_custom_call.1} parent=5 // pred_check
        _
      $region10: #{tpu_custom_call.1} parent=5 // pred_check_branch
        %123 = sbr.rel (%p120) target = $region12
      $region11: #{tpu_custom_call.1} parent=5 // pred_region
        %s124 = ssub.s32 %s16, 1
        // Predicated region
        $region13: #{tpu_custom_call.1} parent=11 // pred_check
          %p125 = pneg %p63
        $region14: #{tpu_custom_call.1} parent=11 // pred_check_branch
          %127 = sbr.rel (%p125) target = $region16
        $region15: #{tpu_custom_call.1} parent=11 // pred_region
          %s129 = ssub.s32 256, 256
          %130 = vsyncadd [#allocation6], %s129
          %s131 = sshll.u32 [#allocation5], 4
          %s132 = int_to_ptr.vmem [resolvable:$true] %s131
          %137 = dma.hbm_to_vmem [thread:$0]  %s1, 256, %s132, [#allocation6], 128, 128, 8
        $region16: #{tpu_custom_call.1} parent=11 // pred_fallthru
          _
        // Predicated region
        $region17: #{tpu_custom_call.1} parent=11 // pred_check
          %p138 = pneg %p84
        $region18: #{tpu_custom_call.1} parent=11 // pred_check_branch
          %140 = sbr.rel (%p138) target = $region20
        $region19: #{tpu_custom_call.1} parent=11 // pred_region
          %s142 = ssub.s32 2048, 2048
          %143 = vsyncadd [#allocation6], %s142
          %s144 = sshll.u32 [#allocation7], 4
          %s145 = int_to_ptr.vmem [resolvable:$true] %s144
          %150 = dma.hbm_to_vmem [thread:$0]  %s2, 2048, %s145, [#allocation6], 128, 128, 8
        $region20: #{tpu_custom_call.1} parent=11 // pred_fallthru
          _
      $region12: #{tpu_custom_call.1} parent=5 // pred_fallthru
        _
      %p151 = scmp.lt.s32.totalorder %s16, 2
      // Predicated region
      $region21: #{tpu_custom_call.1} parent=5 // pred_check
        %p152 = pneg %p151
      $region22: #{tpu_custom_call.1} parent=5 // pred_check_branch
        %154 = sbr.rel (%p152) target = $region24
      $region23: #{tpu_custom_call.1} parent=5 // pred_region
        // Predicated region
        $region25: #{tpu_custom_call.1} parent=23 // pred_check
          %p155 = pneg %p36
        $region26: #{tpu_custom_call.1} parent=23 // pred_check_branch
          %157 = sbr.rel (%p155) target = $region28
        $region27: #{tpu_custom_call.1} parent=23 // pred_region
          %s158 = sand.u32 %s26, 1
          %s159 = scalar_lea.sflag [#allocation3], %s158
          %s160 = sand.u32 %s26, 1
          %s161 = smul.addr %s160, 64
          %s162 = scalar_lea.vmem [#allocation2], %s161
          %s163 = smul.u32 4, %s16
          %s165 = ssub.s32 1024, 1024
          %166 = vsyncadd %s159, %s165
          %s167 = smul.addr %s163, 2
          %s168 = smul.addr %s167, 128
          %s169 = scalar_lea.hbm %s0, %s168
          %s170 = sshll.u32 %s162, 4
          %s171 = int_to_ptr.vmem [resolvable:$true] %s170
          %176 = dma.hbm_to_vmem [thread:$0]  %s169, 1024, %s171, %s159, 128, 128, 8
        $region28: #{tpu_custom_call.1} parent=23 // pred_fallthru
          _
      $region24: #{tpu_custom_call.1} parent=5 // pred_fallthru
        _
      %p177 = scmp.le.s32.totalorder 1, %s16
      %p178 = scmp.lt.s32.totalorder %s16, 3
      %p179 = pnand %p177, %p178
      %p180 = pneg %p179
      // Predicated region
      $region29: #{tpu_custom_call.1} parent=5 // pred_check
        _
      $region30: #{tpu_custom_call.1} parent=5 // pred_check_branch
        %182 = sbr.rel (%p179) target = $region32
      $region31: #{tpu_custom_call.1} parent=5 // pred_region
        %s183 = ssub.s32 %s16, 1
        %s184 = sand.u32 %s29, 1
        %s185 = scalar_lea.sflag [#allocation3], %s184
        %s186 = sand.u32 %s29, 1
        %s187 = smul.addr %s186, 64
        %s188 = scalar_lea.vmem [#allocation2], %s187
        // Predicated region
        $region33: #{tpu_custom_call.1} parent=31 // pred_check
          %p189 = pneg %p42
        $region34: #{tpu_custom_call.1} parent=31 // pred_check_branch
          %191 = sbr.rel (%p189) target = $region36
        $region35: #{tpu_custom_call.1} parent=31 // pred_region
          %192 = dma.done %s185, 1024
        $region36: #{tpu_custom_call.1} parent=31 // pred_fallthru
          _
        // Predicated region
        $region37: #{tpu_custom_call.1} parent=31 // pred_check
          %p193 = pneg %p63
        $region38: #{tpu_custom_call.1} parent=31 // pred_check_branch
          %195 = sbr.rel (%p193) target = $region40
        $region39: #{tpu_custom_call.1} parent=31 // pred_region
          %196 = dma.done [#allocation6], 256
        $region40: #{tpu_custom_call.1} parent=31 // pred_fallthru
          _
        // Predicated region
        $region41: #{tpu_custom_call.1} parent=31 // pred_check
          %p197 = pneg %p84
        $region42: #{tpu_custom_call.1} parent=31 // pred_check_branch
          %199 = sbr.rel (%p197) target = $region44
        $region43: #{tpu_custom_call.1} parent=31 // pred_region
          %200 = dma.done [#allocation6], 2048
        $region44: #{tpu_custom_call.1} parent=31 // pred_fallthru
          _
        %s201 = sand.u32 %s29, 1
        %s202 = scalar_lea.sflag [#allocation3], %s201
        %s203 = sand.u32 %s29, 1
        %s204 = smul.addr %s203, 64
        %s205 = scalar_lea.vmem [#allocation2], %s204
        %p206 = pneg %p42
        %p207 = pneg %p39
        %p208 = pneg %p63
        %p209 = pneg %p60
        %p210 = pneg %p84
        %p211 = pneg %p81
        %p212 = pneg %p110
        %p213 = pneg %p107
        %s214 = sand.u32 %s97, 1
        %s215 = scalar_lea.sflag [#allocation4], %s214
        %s216 = sand.u32 %s97, 1
        %s217 = smul.addr %s216, 256
        %s218 = scalar_lea.vmem [#allocation8], %s217
        %s219 = smul.u32 4, %s21
        %s220 = smul.u32 4, %s21
        %v221 = vld [vmem:[%s188] sm:$0xff]
        %v222 = vld [vmem:[%s188 + $0x8] sm:$0xff]
        %v223 = vld [vmem:[%s188 + $0x10] sm:$0xff]
        %v224 = vld [vmem:[%s188 + $0x18] sm:$0xff]
        %v225 = vld [vmem:[%s188 + $0x20] sm:$0xff]
        %v226 = vld [vmem:[%s188 + $0x28] sm:$0xff]
        %v227 = vld [vmem:[%s188 + $0x30] sm:$0xff]
        %v228 = vld [vmem:[%s188 + $0x38] sm:$0xff]
        %v229 = vld [vmem:[#allocation7] sm:$0xff]
        %v230 = vld [vmem:[#allocation7 + $0x8] sm:$0xff]
        %v231 = vld [vmem:[#allocation7 + $0x10] sm:$0xff]
        %v232 = vld [vmem:[#allocation7 + $0x18] sm:$0xff]
        %v233 = vld [vmem:[#allocation7 + $0x20] sm:$0xff]
        %v234 = vld [vmem:[#allocation7 + $0x28] sm:$0xff]
        %v235 = vld [vmem:[#allocation7 + $0x30] sm:$0xff]
        %v236 = vld [vmem:[#allocation7 + $0x38] sm:$0xff]
        %v237 = vld [vmem:[#allocation7 + $0x40] sm:$0xff]
        %v238 = vld [vmem:[#allocation7 + $0x48] sm:$0xff]
        %v239 = vld [vmem:[#allocation7 + $0x50] sm:$0xff]
        %v240 = vld [vmem:[#allocation7 + $0x58] sm:$0xff]
        %v241 = vld [vmem:[#allocation7 + $0x60] sm:$0xff]
        %v242 = vld [vmem:[#allocation7 + $0x68] sm:$0xff]
        %v243 = vld [vmem:[#allocation7 + $0x70] sm:$0xff]
        %v244 = vld [vmem:[#allocation7 + $0x78] sm:$0xff]
        %245 = vmatprep.subr.mxu0 0.0
        %246 = vmatpush1.msra.mxu0 %v229
        %247 = vmatprep.subr.mxu0 0.0
        %248 = vmatpush1.msra.mxu0 %v230
        %249 = vmatprep.subr.mxu0 0.0
        %250 = vmatpush1.msra.mxu0 %v231
        %251 = vmatprep.subr.mxu0 0.0
        %252 = vmatpush1.msra.mxu0 %v232
        %253 = vmatprep.subr.mxu0 0.0
        %254 = vmatpush1.msra.mxu0 %v233
        %255 = vmatprep.subr.mxu0 0.0
        %256 = vmatpush1.msra.mxu0 %v234
        %257 = vmatprep.subr.mxu0 0.0
        %258 = vmatpush1.msra.mxu0 %v235
        %259 = vmatprep.subr.mxu0 0.0
        %260 = vmatpush1.msra.mxu0 %v236
        %261 = vmatprep.subr.mxu0 0.0
        %262 = vmatpush1.msra.mxu0 %v237
        %263 = vmatprep.subr.mxu0 0.0
        %264 = vmatpush1.msra.mxu0 %v238
        %265 = vmatprep.subr.mxu0 0.0
        %266 = vmatpush1.msra.mxu0 %v239
        %267 = vmatprep.subr.mxu0 0.0
        %268 = vmatpush1.msra.mxu0 %v240
        %269 = vmatprep.subr.mxu0 0.0
        %270 = vmatpush1.msra.mxu0 %v241
        %271 = vmatprep.subr.mxu0 0.0
        %272 = vmatpush1.msra.mxu0 %v242
        %273 = vmatprep.subr.mxu0 0.0
        %274 = vmatpush1.msra.mxu0 %v243
        %275 = vmatprep.subr.mxu0 0.0
        %276 = vmatpush1.msra.mxu0 %v244
        %277 = vmatprep.subr.mxu0 0.0
        %278 = vmatpush1.msra.mxu0 0.0
        %279 = vmatprep.subr.mxu0 0.0
        %280 = vmatpush1.msra.mxu0 0.0
        %281 = vmatprep.subr.mxu0 0.0
        %282 = vmatpush1.msra.mxu0 0.0
        %283 = vmatprep.subr.mxu0 0.0
        %284 = vmatpush1.msra.mxu0 0.0
        %285 = vmatprep.subr.mxu0 0.0
        %286 = vmatpush1.msra.mxu0 0.0
        %287 = vmatprep.subr.mxu0 0.0
        %288 = vmatpush1.msra.mxu0 0.0
        %289 = vmatprep.subr.mxu0 0.0
        %290 = vmatpush1.msra.mxu0 0.0
        %291 = vmatprep.subr.mxu0 0.0
        %292 = vmatpush1.msra.mxu0 0.0
        %293 = vmatprep.subr.mxu0 0.0
        %294 = vmatpush1.msra.mxu0 0.0
        %295 = vmatprep.subr.mxu0 0.0
        %296 = vmatpush1.msra.mxu0 0.0
        %297 = vmatprep.subr.mxu0 0.0
        %298 = vmatpush1.msra.mxu0 0.0
        %299 = vmatprep.subr.mxu0 0.0
        %300 = vmatpush1.msra.mxu0 0.0
        %301 = vmatprep.subr.mxu0 0.0
        %302 = vmatpush1.msra.mxu0 0.0
        %303 = vmatprep.subr.mxu0 0.0
        %304 = vmatpush1.msra.mxu0 0.0
        %305 = vmatprep.subr.mxu0 0.0
        %306 = vmatpush1.msra.mxu0 0.0
        %307 = vmatprep.subr.mxu0 0.0
        %308 = vmatpush1.msra.mxu0 0.0
        %309 = vmatprep.mubr.f32.mxu0 0.0
        %310 = vmatmul.mubr.f32.gmra.mrb[0].mxu0 %v221
        %v311 = vpop.f32.mrb[0].mxu0
        %v312 = vadd.f32 0.0, %v311
        %v313 = vpop.f32.mrb[0].mxu0
        %314 = vmatprep.mubr.f32.mxu0 0.0
        %315 = vmatmul.mubr.f32.gmra.mrb[0].mxu0 %v222
        %v316 = vpop.f32.mrb[0].mxu0
        %v317 = vadd.f32 0.0, %v316
        %v318 = vpop.f32.mrb[0].mxu0
        %319 = vmatprep.mubr.f32.mxu0 0.0
        %320 = vmatmul.mubr.f32.gmra.mrb[0].mxu0 %v223
        %v321 = vpop.f32.mrb[0].mxu0
        %v322 = vadd.f32 0.0, %v321
        %v323 = vpop.f32.mrb[0].mxu0
        %324 = vmatprep.mubr.f32.mxu0 0.0
        %325 = vmatmul.mubr.f32.gmra.mrb[0].mxu0 %v224
        %v326 = vpop.f32.mrb[0].mxu0
        %v327 = vadd.f32 0.0, %v326
        %v328 = vpop.f32.mrb[0].mxu0
        %329 = vmatprep.mubr.f32.mxu0 0.0
        %330 = vmatmul.mubr.f32.gmra.mrb[0].mxu0 %v225
        %v331 = vpop.f32.mrb[0].mxu0
        %v332 = vadd.f32 0.0, %v331
        %v333 = vpop.f32.mrb[0].mxu0
        %334 = vmatprep.mubr.f32.mxu0 0.0
        %335 = vmatmul.mubr.f32.gmra.mrb[0].mxu0 %v226
        %v336 = vpop.f32.mrb[0].mxu0
        %v337 = vadd.f32 0.0, %v336
        %v338 = vpop.f32.mrb[0].mxu0
        %339 = vmatprep.mubr.f32.mxu0 0.0
        %340 = vmatmul.mubr.f32.gmra.mrb[0].mxu0 %v227
        %v341 = vpop.f32.mrb[0].mxu0
        %v342 = vadd.f32 0.0, %v341
        %v343 = vpop.f32.mrb[0].mxu0
        %344 = vmatprep.mubr.f32.mxu0 0.0
        %345 = vmatmul.mubr.f32.gmra.mrb[0].mxu0 %v228
        %v346 = vpop.f32.mrb[0].mxu0
        %v347 = vadd.f32 0.0, %v346
        %v348 = vpop.f32.mrb[0].mxu0
        %349 = vdwg.mxu0
        %350 = vxpose.xlu0.b32.start [1/16] %v312, 128
        %351 = vxpose.xlu0.b32.cont [2/16] %v317, 128
        %352 = vxpose.xlu0.b32.cont [3/16] 0.0, 128
        %353 = vxpose.xlu0.b32.cont [4/16] 0.0, 128
        %354 = vxpose.xlu0.b32.cont [5/16] 0.0, 128
        %355 = vxpose.xlu0.b32.cont [6/16] 0.0, 128
        %356 = vxpose.xlu0.b32.cont [7/16] 0.0, 128
        %357 = vxpose.xlu0.b32.cont [8/16] 0.0, 128
        %358 = vxpose.xlu0.b32.cont [9/16] 0.0, 128
        %359 = vxpose.xlu0.b32.cont [10/16] 0.0, 128
        %360 = vxpose.xlu0.b32.cont [11/16] 0.0, 128
        %361 = vxpose.xlu0.b32.cont [12/16] 0.0, 128
        %362 = vxpose.xlu0.b32.cont [13/16] 0.0, 128
        %363 = vxpose.xlu0.b32.cont [14/16] 0.0, 128
        %364 = vxpose.xlu0.b32.cont [15/16] 0.0, 128
        %365 = vxpose.xlu0.b32.end [16/16] 0.0, 128
        %v366 = vpop.trf.xlu0
        %v367 = vpop.trf.xlu0
        %v368 = vpop.trf.xlu0
        %v369 = vpop.trf.xlu0
        %v370 = vpop.trf.xlu0
        %v371 = vpop.trf.xlu0
        %v372 = vpop.trf.xlu0
        %v373 = vpop.trf.xlu0
        %v374 = vpop.trf.xlu0
        %v375 = vpop.trf.xlu0
        %v376 = vpop.trf.xlu0
        %v377 = vpop.trf.xlu0
        %v378 = vpop.trf.xlu0
        %v379 = vpop.trf.xlu0
        %v380 = vpop.trf.xlu0
        %v381 = vpop.trf.xlu0
        %382 = vxpose.xlu0.b32.start [1/16] %v322, 128
        %383 = vxpose.xlu0.b32.cont [2/16] %v327, 128
        %384 = vxpose.xlu0.b32.cont [3/16] 0.0, 128
        %385 = vxpose.xlu0.b32.cont [4/16] 0.0, 128
        %386 = vxpose.xlu0.b32.cont [5/16] 0.0, 128
        %387 = vxpose.xlu0.b32.cont [6/16] 0.0, 128
        %388 = vxpose.xlu0.b32.cont [7/16] 0.0, 128
        %389 = vxpose.xlu0.b32.cont [8/16] 0.0, 128
        %390 = vxpose.xlu0.b32.cont [9/16] 0.0, 128
        %391 = vxpose.xlu0.b32.cont [10/16] 0.0, 128
        %392 = vxpose.xlu0.b32.cont [11/16] 0.0, 128
        %393 = vxpose.xlu0.b32.cont [12/16] 0.0, 128
        %394 = vxpose.xlu0.b32.cont [13/16] 0.0, 128
        %395 = vxpose.xlu0.b32.cont [14/16] 0.0, 128
        %396 = vxpose.xlu0.b32.cont [15/16] 0.0, 128
        %397 = vxpose.xlu0.b32.end [16/16] 0.0, 128
        %v398 = vpop.trf.xlu0
        %v399 = vpop.trf.xlu0
        %v400 = vpop.trf.xlu0
        %v401 = vpop.trf.xlu0
        %v402 = vpop.trf.xlu0
        %v403 = vpop.trf.xlu0
        %v404 = vpop.trf.xlu0
        %v405 = vpop.trf.xlu0
        %v406 = vpop.trf.xlu0
        %v407 = vpop.trf.xlu0
        %v408 = vpop.trf.xlu0
        %v409 = vpop.trf.xlu0
        %v410 = vpop.trf.xlu0
        %v411 = vpop.trf.xlu0
        %v412 = vpop.trf.xlu0
        %v413 = vpop.trf.xlu0
        %414 = vxpose.xlu0.b32.start [1/16] %v332, 128
        %415 = vxpose.xlu0.b32.cont [2/16] %v337, 128
        %416 = vxpose.xlu0.b32.cont [3/16] 0.0, 128
        %417 = vxpose.xlu0.b32.cont [4/16] 0.0, 128
        %418 = vxpose.xlu0.b32.cont [5/16] 0.0, 128
        %419 = vxpose.xlu0.b32.cont [6/16] 0.0, 128
        %420 = vxpose.xlu0.b32.cont [7/16] 0.0, 128
        %421 = vxpose.xlu0.b32.cont [8/16] 0.0, 128
        %422 = vxpose.xlu0.b32.cont [9/16] 0.0, 128
        %423 = vxpose.xlu0.b32.cont [10/16] 0.0, 128
        %424 = vxpose.xlu0.b32.cont [11/16] 0.0, 128
        %425 = vxpose.xlu0.b32.cont [12/16] 0.0, 128
        %426 = vxpose.xlu0.b32.cont [13/16] 0.0, 128
        %427 = vxpose.xlu0.b32.cont [14/16] 0.0, 128
        %428 = vxpose.xlu0.b32.cont [15/16] 0.0, 128
        %429 = vxpose.xlu0.b32.end [16/16] 0.0, 128
        %v430 = vpop.trf.xlu0
        %v431 = vpop.trf.xlu0
        %v432 = vpop.trf.xlu0
        %v433 = vpop.trf.xlu0
        %v434 = vpop.trf.xlu0
        %v435 = vpop.trf.xlu0
        %v436 = vpop.trf.xlu0
        %v437 = vpop.trf.xlu0
        %v438 = vpop.trf.xlu0
        %v439 = vpop.trf.xlu0
        %v440 = vpop.trf.xlu0
        %v441 = vpop.trf.xlu0
        %v442 = vpop.trf.xlu0
        %v443 = vpop.trf.xlu0
        %v444 = vpop.trf.xlu0
        %v445 = vpop.trf.xlu0
        %446 = vxpose.xlu0.b32.start [1/16] %v342, 128
        %447 = vxpose.xlu0.b32.cont [2/16] %v347, 128
        %448 = vxpose.xlu0.b32.cont [3/16] 0.0, 128
        %449 = vxpose.xlu0.b32.cont [4/16] 0.0, 128
        %450 = vxpose.xlu0.b32.cont [5/16] 0.0, 128
        %451 = vxpose.xlu0.b32.cont [6/16] 0.0, 128
        %452 = vxpose.xlu0.b32.cont [7/16] 0.0, 128
        %453 = vxpose.xlu0.b32.cont [8/16] 0.0, 128
        %454 = vxpose.xlu0.b32.cont [9/16] 0.0, 128
        %455 = vxpose.xlu0.b32.cont [10/16] 0.0, 128
        %456 = vxpose.xlu0.b32.cont [11/16] 0.0, 128
        %457 = vxpose.xlu0.b32.cont [12/16] 0.0, 128
        %458 = vxpose.xlu0.b32.cont [13/16] 0.0, 128
        %459 = vxpose.xlu0.b32.cont [14/16] 0.0, 128
        %460 = vxpose.xlu0.b32.cont [15/16] 0.0, 128
        %461 = vxpose.xlu0.b32.end [16/16] 0.0, 128
        %v462 = vpop.trf.xlu0
        %v463 = vpop.trf.xlu0
        %v464 = vpop.trf.xlu0
        %v465 = vpop.trf.xlu0
        %v466 = vpop.trf.xlu0
        %v467 = vpop.trf.xlu0
        %v468 = vpop.trf.xlu0
        %v469 = vpop.trf.xlu0
        %v470 = vpop.trf.xlu0
        %v471 = vpop.trf.xlu0
        %v472 = vpop.trf.xlu0
        %v473 = vpop.trf.xlu0
        %v474 = vpop.trf.xlu0
        %v475 = vpop.trf.xlu0
        %v476 = vpop.trf.xlu0
        %v477 = vpop.trf.xlu0
        %v478 = vld [vmem:[#allocation5] sm:$0xff]
        %v479 = vld [vmem:[#allocation5 + $0x8] sm:$0xff]
        %vm480 = vcmask 130048
        %v482 = vsel %vm480, %v366, 0
        %v485 = vsel %vm480, %v367, 0
        %v488 = vsel %vm480, %v368, 0
        %v491 = vsel %vm480, %v369, 0
        %v494 = vsel %vm480, %v370, 0
        %v497 = vsel %vm480, %v371, 0
        %v500 = vsel %vm480, %v372, 0
        %v503 = vsel %vm480, %v373, 0
        %v506 = vsel %vm480, %v374, 0
        %v509 = vsel %vm480, %v375, 0
        %v512 = vsel %vm480, %v376, 0
        %v515 = vsel %vm480, %v377, 0
        %v518 = vsel %vm480, %v378, 0
        %v521 = vsel %vm480, %v379, 0
        %v524 = vsel %vm480, %v380, 0
        %v527 = vsel %vm480, %v381, 0
        %v530 = vsel %vm480, %v398, 0
        %v533 = vsel %vm480, %v399, 0
        %v536 = vsel %vm480, %v400, 0
        %v539 = vsel %vm480, %v401, 0
        %v542 = vsel %vm480, %v402, 0
        %v545 = vsel %vm480, %v403, 0
        %v548 = vsel %vm480, %v404, 0
        %v551 = vsel %vm480, %v405, 0
        %v554 = vsel %vm480, %v406, 0
        %v557 = vsel %vm480, %v407, 0
        %v560 = vsel %vm480, %v408, 0
        %v563 = vsel %vm480, %v409, 0
        %v566 = vsel %vm480, %v410, 0
        %v569 = vsel %vm480, %v411, 0
        %v572 = vsel %vm480, %v412, 0
        %v575 = vsel %vm480, %v413, 0
        %v578 = vsel %vm480, %v430, 0
        %v581 = vsel %vm480, %v431, 0
        %v584 = vsel %vm480, %v432, 0
        %v587 = vsel %vm480, %v433, 0
        %v590 = vsel %vm480, %v434, 0
        %v593 = vsel %vm480, %v435, 0
        %v596 = vsel %vm480, %v436, 0
        %v599 = vsel %vm480, %v437, 0
        %v602 = vsel %vm480, %v438, 0
        %v605 = vsel %vm480, %v439, 0
        %v608 = vsel %vm480, %v440, 0
        %v611 = vsel %vm480, %v441, 0
        %v614 = vsel %vm480, %v442, 0
        %v617 = vsel %vm480, %v443, 0
        %v620 = vsel %vm480, %v444, 0
        %v623 = vsel %vm480, %v445, 0
        %v626 = vsel %vm480, %v462, 0
        %v629 = vsel %vm480, %v463, 0
        %v632 = vsel %vm480, %v464, 0
        %v635 = vsel %vm480, %v465, 0
        %v638 = vsel %vm480, %v466, 0
        %v641 = vsel %vm480, %v467, 0
        %v644 = vsel %vm480, %v468, 0
        %v647 = vsel %vm480, %v469, 0
        %v650 = vsel %vm480, %v470, 0
        %v653 = vsel %vm480, %v471, 0
        %v656 = vsel %vm480, %v472, 0
        %v659 = vsel %vm480, %v473, 0
        %v662 = vsel %vm480, %v474, 0
        %v665 = vsel %vm480, %v475, 0
        %v668 = vsel %vm480, %v476, 0
        %v671 = vsel %vm480, %v477, 0
        %673 = vmatprep.subr.mxu0 0.0
        %674 = vmatpush1.msra.mxu0 %v478
        %675 = vmatprep.subr.mxu0 0.0
        %676 = vmatpush1.msra.mxu0 %v479
        %677 = vmatprep.subr.mxu0 0.0
        %678 = vmatpush1.msra.mxu0 0.0
        %679 = vmatprep.subr.mxu0 0.0
        %680 = vmatpush1.msra.mxu0 0.0
        %681 = vmatprep.subr.mxu0 0.0
        %682 = vmatpush1.msra.mxu0 0.0
        %683 = vmatprep.subr.mxu0 0.0
        %684 = vmatpush1.msra.mxu0 0.0
        %685 = vmatprep.subr.mxu0 0.0
        %686 = vmatpush1.msra.mxu0 0.0
        %687 = vmatprep.subr.mxu0 0.0
        %688 = vmatpush1.msra.mxu0 0.0
        %689 = vmatprep.subr.mxu0 0.0
        %690 = vmatpush1.msra.mxu0 0.0
        %691 = vmatprep.subr.mxu0 0.0
        %692 = vmatpush1.msra.mxu0 0.0
        %693 = vmatprep.subr.mxu0 0.0
        %694 = vmatpush1.msra.mxu0 0.0
        %695 = vmatprep.subr.mxu0 0.0
        %696 = vmatpush1.msra.mxu0 0.0
        %697 = vmatprep.subr.mxu0 0.0
        %698 = vmatpush1.msra.mxu0 0.0
        %699 = vmatprep.subr.mxu0 0.0
        %700 = vmatpush1.msra.mxu0 0.0
        %701 = vmatprep.subr.mxu0 0.0
        %702 = vmatpush1.msra.mxu0 0.0
        %703 = vmatprep.subr.mxu0 0.0
        %704 = vmatpush1.msra.mxu0 0.0
        %705 = vmatprep.subr.mxu0 0.0
        %706 = vmatpush1.msra.mxu0 0.0
        %707 = vmatprep.subr.mxu0 0.0
        %708 = vmatpush1.msra.mxu0 0.0
        %709 = vmatprep.subr.mxu0 0.0
        %710 = vmatpush1.msra.mxu0 0.0
        %711 = vmatprep.subr.mxu0 0.0
        %712 = vmatpush1.msra.mxu0 0.0
        %713 = vmatprep.subr.mxu0 0.0
        %714 = vmatpush1.msra.mxu0 0.0
        %715 = vmatprep.subr.mxu0 0.0
        %716 = vmatpush1.msra.mxu0 0.0
        %717 = vmatprep.subr.mxu0 0.0
        %718 = vmatpush1.msra.mxu0 0.0
        %719 = vmatprep.subr.mxu0 0.0
        %720 = vmatpush1.msra.mxu0 0.0
        %721 = vmatprep.subr.mxu0 0.0
        %722 = vmatpush1.msra.mxu0 0.0
        %723 = vmatprep.subr.mxu0 0.0
        %724 = vmatpush1.msra.mxu0 0.0
        %725 = vmatprep.subr.mxu0 0.0
        %726 = vmatpush1.msra.mxu0 0.0
        %727 = vmatprep.subr.mxu0 0.0
        %728 = vmatpush1.msra.mxu0 0.0
        %729 = vmatprep.subr.mxu0 0.0
        %730 = vmatpush1.msra.mxu0 0.0
        %731 = vmatprep.subr.mxu0 0.0
        %732 = vmatpush1.msra.mxu0 0.0
        %733 = vmatprep.subr.mxu0 0.0
        %734 = vmatpush1.msra.mxu0 0.0
        %735 = vmatprep.subr.mxu0 0.0
        %736 = vmatpush1.msra.mxu0 0.0
        %737 = vmatprep.mubr.f32.mxu0 0.0
        %738 = vmatmul.mubr.f32.gmra.mrb[0].mxu0 %v482
        %v739 = vpop.f32.mrb[0].mxu0
        %v740 = vadd.f32 0.0, %v739
        %v741 = vpop.f32.mrb[0].mxu0
        %742 = vmatprep.mubr.f32.mxu0 0.0
        %743 = vmatmul.mubr.f32.gmra.mrb[0].mxu0 %v485
        %v744 = vpop.f32.mrb[0].mxu0
        %v745 = vadd.f32 0.0, %v744
        %v746 = vpop.f32.mrb[0].mxu0
        %747 = vmatprep.mubr.f32.mxu0 0.0
        %748 = vmatmul.mubr.f32.gmra.mrb[0].mxu0 %v488
        %v749 = vpop.f32.mrb[0].mxu0
        %v750 = vadd.f32 0.0, %v749
        %v751 = vpop.f32.mrb[0].mxu0
        %752 = vmatprep.mubr.f32.mxu0 0.0
        %753 = vmatmul.mubr.f32.gmra.mrb[0].mxu0 %v491
        %v754 = vpop.f32.mrb[0].mxu0
        %v755 = vadd.f32 0.0, %v754
        %v756 = vpop.f32.mrb[0].mxu0
        %757 = vmatprep.mubr.f32.mxu0 0.0
        %758 = vmatmul.mubr.f32.gmra.mrb[0].mxu0 %v494
        %v759 = vpop.f32.mrb[0].mxu0
        %v760 = vadd.f32 0.0, %v759
        %v761 = vpop.f32.mrb[0].mxu0
        %762 = vmatprep.mubr.f32.mxu0 0.0
        %763 = vmatmul.mubr.f32.gmra.mrb[0].mxu0 %v497
        %v764 = vpop.f32.mrb[0].mxu0
        %v765 = vadd.f32 0.0, %v764
        %v766 = vpop.f32.mrb[0].mxu0
        %767 = vmatprep.mubr.f32.mxu0 0.0
        %768 = vmatmul.mubr.f32.gmra.mrb[0].mxu0 %v500
        %v769 = vpop.f32.mrb[0].mxu0
        %v770 = vadd.f32 0.0, %v769
        %v771 = vpop.f32.mrb[0].mxu0
        %772 = vmatprep.mubr.f32.mxu0 0.0
        %773 = vmatmul.mubr.f32.gmra.mrb[0].mxu0 %v503
        %v774 = vpop.f32.mrb[0].mxu0
        %v775 = vadd.f32 0.0, %v774
        %v776 = vpop.f32.mrb[0].mxu0
        %777 = vmatprep.mubr.f32.mxu0 0.0
        %778 = vmatmul.mubr.f32.gmra.mrb[0].mxu0 %v506
        %v779 = vpop.f32.mrb[0].mxu0
        %v780 = vadd.f32 0.0, %v779
        %v781 = vpop.f32.mrb[0].mxu0
        %782 = vmatprep.mubr.f32.mxu0 0.0
        %783 = vmatmul.mubr.f32.gmra.mrb[0].mxu0 %v509
        %v784 = vpop.f32.mrb[0].mxu0
        %v785 = vadd.f32 0.0, %v784
        %v786 = vpop.f32.mrb[0].mxu0
        %787 = vmatprep.mubr.f32.mxu0 0.0
        %788 = vmatmul.mubr.f32.gmra.mrb[0].mxu0 %v512
        %v789 = vpop.f32.mrb[0].mxu0
        %v790 = vadd.f32 0.0, %v789
        %v791 = vpop.f32.mrb[0].mxu0
        %792 = vmatprep.mubr.f32.mxu0 0.0
        %793 = vmatmul.mubr.f32.gmra.mrb[0].mxu0 %v515
        %v794 = vpop.f32.mrb[0].mxu0
        %v795 = vadd.f32 0.0, %v794
        %v796 = vpop.f32.mrb[0].mxu0
        %797 = vmatprep.mubr.f32.mxu0 0.0
        %798 = vmatmul.mubr.f32.gmra.mrb[0].mxu0 %v518
        %v799 = vpop.f32.mrb[0].mxu0
        %v800 = vadd.f32 0.0, %v799
        %v801 = vpop.f32.mrb[0].mxu0
        %802 = vmatprep.mubr.f32.mxu0 0.0
        %803 = vmatmul.mubr.f32.gmra.mrb[0].mxu0 %v521
        %v804 = vpop.f32.mrb[0].mxu0
        %v805 = vadd.f32 0.0, %v804
        %v806 = vpop.f32.mrb[0].mxu0
        %807 = vmatprep.mubr.f32.mxu0 0.0
        %808 = vmatmul.mubr.f32.gmra.mrb[0].mxu0 %v524
        %v809 = vpop.f32.mrb[0].mxu0
        %v810 = vadd.f32 0.0, %v809
        %v811 = vpop.f32.mrb[0].mxu0
        %812 = vmatprep.mubr.f32.mxu0 0.0
        %813 = vmatmul.mubr.f32.gmra.mrb[0].mxu0 %v527
        %v814 = vpop.f32.mrb[0].mxu0
        %v815 = vadd.f32 0.0, %v814
        %v816 = vpop.f32.mrb[0].mxu0
        %817 = vmatprep.mubr.f32.mxu0 0.0
        %818 = vmatmul.mubr.f32.gmra.mrb[0].mxu0 %v530
        %v819 = vpop.f32.mrb[0].mxu0
        %v820 = vadd.f32 0.0, %v819
        %v821 = vpop.f32.mrb[0].mxu0
        %822 = vmatprep.mubr.f32.mxu0 0.0
        %823 = vmatmul.mubr.f32.gmra.mrb[0].mxu0 %v533
        %v824 = vpop.f32.mrb[0].mxu0
        %v825 = vadd.f32 0.0, %v824
        %v826 = vpop.f32.mrb[0].mxu0
        %827 = vmatprep.mubr.f32.mxu0 0.0
        %828 = vmatmul.mubr.f32.gmra.mrb[0].mxu0 %v536
        %v829 = vpop.f32.mrb[0].mxu0
        %v830 = vadd.f32 0.0, %v829
        %v831 = vpop.f32.mrb[0].mxu0
        %832 = vmatprep.mubr.f32.mxu0 0.0
        %833 = vmatmul.mubr.f32.gmra.mrb[0].mxu0 %v539
        %v834 = vpop.f32.mrb[0].mxu0
        %v835 = vadd.f32 0.0, %v834
        %v836 = vpop.f32.mrb[0].mxu0
        %837 = vmatprep.mubr.f32.mxu0 0.0
        %838 = vmatmul.mubr.f32.gmra.mrb[0].mxu0 %v542
        %v839 = vpop.f32.mrb[0].mxu0
        %v840 = vadd.f32 0.0, %v839
        %v841 = vpop.f32.mrb[0].mxu0
        %842 = vmatprep.mubr.f32.mxu0 0.0
        %843 = vmatmul.mubr.f32.gmra.mrb[0].mxu0 %v545
        %v844 = vpop.f32.mrb[0].mxu0
        %v845 = vadd.f32 0.0, %v844
        %v846 = vpop.f32.mrb[0].mxu0
        %847 = vmatprep.mubr.f32.mxu0 0.0
        %848 = vmatmul.mubr.f32.gmra.mrb[0].mxu0 %v548
        %v849 = vpop.f32.mrb[0].mxu0
        %v850 = vadd.f32 0.0, %v849
        %v851 = vpop.f32.mrb[0].mxu0
        %852 = vmatprep.mubr.f32.mxu0 0.0
        %853 = vmatmul.mubr.f32.gmra.mrb[0].mxu0 %v551
        %v854 = vpop.f32.mrb[0].mxu0
        %v855 = vadd.f32 0.0, %v854
        %v856 = vpop.f32.mrb[0].mxu0
        %857 = vmatprep.mubr.f32.mxu0 0.0
        %858 = vmatmul.mubr.f32.gmra.mrb[0].mxu0 %v554
        %v859 = vpop.f32.mrb[0].mxu0
        %v860 = vadd.f32 0.0, %v859
        %v861 = vpop.f32.mrb[0].mxu0
        %862 = vmatprep.mubr.f32.mxu0 0.0
        %863 = vmatmul.mubr.f32.gmra.mrb[0].mxu0 %v557
        %v864 = vpop.f32.mrb[0].mxu0
        %v865 = vadd.f32 0.0, %v864
        %v866 = vpop.f32.mrb[0].mxu0
        %867 = vmatprep.mubr.f32.mxu0 0.0
        %868 = vmatmul.mubr.f32.gmra.mrb[0].mxu0 %v560
        %v869 = vpop.f32.mrb[0].mxu0
        %v870 = vadd.f32 0.0, %v869
        %v871 = vpop.f32.mrb[0].mxu0
        %872 = vmatprep.mubr.f32.mxu0 0.0
        %873 = vmatmul.mubr.f32.gmra.mrb[0].mxu0 %v563
        %v874 = vpop.f32.mrb[0].mxu0
        %v875 = vadd.f32 0.0, %v874
        %v876 = vpop.f32.mrb[0].mxu0
        %877 = vmatprep.mubr.f32.mxu0 0.0
        %878 = vmatmul.mubr.f32.gmra.mrb[0].mxu0 %v566
        %v879 = vpop.f32.mrb[0].mxu0
        %v880 = vadd.f32 0.0, %v879
        %v881 = vpop.f32.mrb[0].mxu0
        %882 = vmatprep.mubr.f32.mxu0 0.0
        %883 = vmatmul.mubr.f32.gmra.mrb[0].mxu0 %v569
        %v884 = vpop.f32.mrb[0].mxu0
        %v885 = vadd.f32 0.0, %v884
        %v886 = vpop.f32.mrb[0].mxu0
        %887 = vmatprep.mubr.f32.mxu0 0.0
        %888 = vmatmul.mubr.f32.gmra.mrb[0].mxu0 %v572
        %v889 = vpop.f32.mrb[0].mxu0
        %v890 = vadd.f32 0.0, %v889
        %v891 = vpop.f32.mrb[0].mxu0
        %892 = vmatprep.mubr.f32.mxu0 0.0
        %893 = vmatmul.mubr.f32.gmra.mrb[0].mxu0 %v575
        %v894 = vpop.f32.mrb[0].mxu0
        %v895 = vadd.f32 0.0, %v894
        %v896 = vpop.f32.mrb[0].mxu0
        %897 = vmatprep.mubr.f32.mxu0 0.0
        %898 = vmatmul.mubr.f32.gmra.mrb[0].mxu0 %v578
        %v899 = vpop.f32.mrb[0].mxu0
        %v900 = vadd.f32 0.0, %v899
        %v901 = vpop.f32.mrb[0].mxu0
        %902 = vmatprep.mubr.f32.mxu0 0.0
        %903 = vmatmul.mubr.f32.gmra.mrb[0].mxu0 %v581
        %v904 = vpop.f32.mrb[0].mxu0
        %v905 = vadd.f32 0.0, %v904
        %v906 = vpop.f32.mrb[0].mxu0
        %907 = vmatprep.mubr.f32.mxu0 0.0
        %908 = vmatmul.mubr.f32.gmra.mrb[0].mxu0 %v584
        %v909 = vpop.f32.mrb[0].mxu0
        %v910 = vadd.f32 0.0, %v909
        %v911 = vpop.f32.mrb[0].mxu0
        %912 = vmatprep.mubr.f32.mxu0 0.0
        %913 = vmatmul.mubr.f32.gmra.mrb[0].mxu0 %v587
        %v914 = vpop.f32.mrb[0].mxu0
        %v915 = vadd.f32 0.0, %v914
        %v916 = vpop.f32.mrb[0].mxu0
        %917 = vmatprep.mubr.f32.mxu0 0.0
        %918 = vmatmul.mubr.f32.gmra.mrb[0].mxu0 %v590
        %v919 = vpop.f32.mrb[0].mxu0
        %v920 = vadd.f32 0.0, %v919
        %v921 = vpop.f32.mrb[0].mxu0
        %922 = vmatprep.mubr.f32.mxu0 0.0
        %923 = vmatmul.mubr.f32.gmra.mrb[0].mxu0 %v593
        %v924 = vpop.f32.mrb[0].mxu0
        %v925 = vadd.f32 0.0, %v924
        %v926 = vpop.f32.mrb[0].mxu0
        %927 = vmatprep.mubr.f32.mxu0 0.0
        %928 = vmatmul.mubr.f32.gmra.mrb[0].mxu0 %v596
        %v929 = vpop.f32.mrb[0].mxu0
        %v930 = vadd.f32 0.0, %v929
        %v931 = vpop.f32.mrb[0].mxu0
        %932 = vmatprep.mubr.f32.mxu0 0.0
        %933 = vmatmul.mubr.f32.gmra.mrb[0].mxu0 %v599
        %v934 = vpop.f32.mrb[0].mxu0
        %v935 = vadd.f32 0.0, %v934
        %v936 = vpop.f32.mrb[0].mxu0
        %937 = vmatprep.mubr.f32.mxu0 0.0
        %938 = vmatmul.mubr.f32.gmra.mrb[0].mxu0 %v602
        %v939 = vpop.f32.mrb[0].mxu0
        %v940 = vadd.f32 0.0, %v939
        %v941 = vpop.f32.mrb[0].mxu0
        %942 = vmatprep.mubr.f32.mxu0 0.0
        %943 = vmatmul.mubr.f32.gmra.mrb[0].mxu0 %v605
        %v944 = vpop.f32.mrb[0].mxu0
        %v945 = vadd.f32 0.0, %v944
        %v946 = vpop.f32.mrb[0].mxu0
        %947 = vmatprep.mubr.f32.mxu0 0.0
        %948 = vmatmul.mubr.f32.gmra.mrb[0].mxu0 %v608
        %v949 = vpop.f32.mrb[0].mxu0
        %v950 = vadd.f32 0.0, %v949
        %v951 = vpop.f32.mrb[0].mxu0
        %952 = vmatprep.mubr.f32.mxu0 0.0
        %953 = vmatmul.mubr.f32.gmra.mrb[0].mxu0 %v611
        %v954 = vpop.f32.mrb[0].mxu0
        %v955 = vadd.f32 0.0, %v954
        %v956 = vpop.f32.mrb[0].mxu0
        %957 = vmatprep.mubr.f32.mxu0 0.0
        %958 = vmatmul.mubr.f32.gmra.mrb[0].mxu0 %v614
        %v959 = vpop.f32.mrb[0].mxu0
        %v960 = vadd.f32 0.0, %v959
        %v961 = vpop.f32.mrb[0].mxu0
        %962 = vmatprep.mubr.f32.mxu0 0.0
        %963 = vmatmul.mubr.f32.gmra.mrb[0].mxu0 %v617
        %v964 = vpop.f32.mrb[0].mxu0
        %v965 = vadd.f32 0.0, %v964
        %v966 = vpop.f32.mrb[0].mxu0
        %967 = vmatprep.mubr.f32.mxu0 0.0
        %968 = vmatmul.mubr.f32.gmra.mrb[0].mxu0 %v620
        %v969 = vpop.f32.mrb[0].mxu0
        %v970 = vadd.f32 0.0, %v969
        %v971 = vpop.f32.mrb[0].mxu0
        %972 = vmatprep.mubr.f32.mxu0 0.0
        %973 = vmatmul.mubr.f32.gmra.mrb[0].mxu0 %v623
        %v974 = vpop.f32.mrb[0].mxu0
        %v975 = vadd.f32 0.0, %v974
        %v976 = vpop.f32.mrb[0].mxu0
        %977 = vmatprep.mubr.f32.mxu0 0.0
        %978 = vmatmul.mubr.f32.gmra.mrb[0].mxu0 %v626
        %v979 = vpop.f32.mrb[0].mxu0
        %v980 = vadd.f32 0.0, %v979
        %v981 = vpop.f32.mrb[0].mxu0
        %982 = vmatprep.mubr.f32.mxu0 0.0
        %983 = vmatmul.mubr.f32.gmra.mrb[0].mxu0 %v629
        %v984 = vpop.f32.mrb[0].mxu0
        %v985 = vadd.f32 0.0, %v984
        %v986 = vpop.f32.mrb[0].mxu0
        %987 = vmatprep.mubr.f32.mxu0 0.0
        %988 = vmatmul.mubr.f32.gmra.mrb[0].mxu0 %v632
        %v989 = vpop.f32.mrb[0].mxu0
        %v990 = vadd.f32 0.0, %v989
        %v991 = vpop.f32.mrb[0].mxu0
        %992 = vmatprep.mubr.f32.mxu0 0.0
        %993 = vmatmul.mubr.f32.gmra.mrb[0].mxu0 %v635
        %v994 = vpop.f32.mrb[0].mxu0
        %v995 = vadd.f32 0.0, %v994
        %v996 = vpop.f32.mrb[0].mxu0
        %997 = vmatprep.mubr.f32.mxu0 0.0
        %998 = vmatmul.mubr.f32.gmra.mrb[0].mxu0 %v638
        %v999 = vpop.f32.mrb[0].mxu0
        %v1000 = vadd.f32 0.0, %v999
        %v1001 = vpop.f32.mrb[0].mxu0
        %1002 = vmatprep.mubr.f32.mxu0 0.0
        %1003 = vmatmul.mubr.f32.gmra.mrb[0].mxu0 %v641
        %v1004 = vpop.f32.mrb[0].mxu0
        %v1005 = vadd.f32 0.0, %v1004
        %v1006 = vpop.f32.mrb[0].mxu0
        %1007 = vmatprep.mubr.f32.mxu0 0.0
        %1008 = vmatmul.mubr.f32.gmra.mrb[0].mxu0 %v644
        %v1009 = vpop.f32.mrb[0].mxu0
        %v1010 = vadd.f32 0.0, %v1009
        %v1011 = vpop.f32.mrb[0].mxu0
        %1012 = vmatprep.mubr.f32.mxu0 0.0
        %1013 = vmatmul.mubr.f32.gmra.mrb[0].mxu0 %v647
        %v1014 = vpop.f32.mrb[0].mxu0
        %v1015 = vadd.f32 0.0, %v1014
        %v1016 = vpop.f32.mrb[0].mxu0
        %1017 = vmatprep.mubr.f32.mxu0 0.0
        %1018 = vmatmul.mubr.f32.gmra.mrb[0].mxu0 %v650
        %v1019 = vpop.f32.mrb[0].mxu0
        %v1020 = vadd.f32 0.0, %v1019
        %v1021 = vpop.f32.mrb[0].mxu0
        %1022 = vmatprep.mubr.f32.mxu0 0.0
        %1023 = vmatmul.mubr.f32.gmra.mrb[0].mxu0 %v653
        %v1024 = vpop.f32.mrb[0].mxu0
        %v1025 = vadd.f32 0.0, %v1024
        %v1026 = vpop.f32.mrb[0].mxu0
        %1027 = vmatprep.mubr.f32.mxu0 0.0
        %1028 = vmatmul.mubr.f32.gmra.mrb[0].mxu0 %v656
        %v1029 = vpop.f32.mrb[0].mxu0
        %v1030 = vadd.f32 0.0, %v1029
        %v1031 = vpop.f32.mrb[0].mxu0
        %1032 = vmatprep.mubr.f32.mxu0 0.0
        %1033 = vmatmul.mubr.f32.gmra.mrb[0].mxu0 %v659
        %v1034 = vpop.f32.mrb[0].mxu0
        %v1035 = vadd.f32 0.0, %v1034
        %v1036 = vpop.f32.mrb[0].mxu0
        %1037 = vmatprep.mubr.f32.mxu0 0.0
        %1038 = vmatmul.mubr.f32.gmra.mrb[0].mxu0 %v662
        %v1039 = vpop.f32.mrb[0].mxu0
        %v1040 = vadd.f32 0.0, %v1039
        %v1041 = vpop.f32.mrb[0].mxu0
        %1042 = vmatprep.mubr.f32.mxu0 0.0
        %1043 = vmatmul.mubr.f32.gmra.mrb[0].mxu0 %v665
        %v1044 = vpop.f32.mrb[0].mxu0
        %v1045 = vadd.f32 0.0, %v1044
        %v1046 = vpop.f32.mrb[0].mxu0
        %1047 = vmatprep.mubr.f32.mxu0 0.0
        %1048 = vmatmul.mubr.f32.gmra.mrb[0].mxu0 %v668
        %v1049 = vpop.f32.mrb[0].mxu0
        %v1050 = vadd.f32 0.0, %v1049
        %v1051 = vpop.f32.mrb[0].mxu0
        %1052 = vmatprep.mubr.f32.mxu0 0.0
        %1053 = vmatmul.mubr.f32.gmra.mrb[0].mxu0 %v671
        %v1054 = vpop.f32.mrb[0].mxu0
        %v1055 = vadd.f32 0.0, %v1054
        %v1056 = vpop.f32.mrb[0].mxu0
        %1057 = vdwg.mxu0
        %1058 = vxpose.xlu0.b32.start [1/16] %v740, 128
        %1059 = vxpose.xlu0.b32.cont [2/16] %v745, 128
        %1060 = vxpose.xlu0.b32.cont [3/16] %v750, 128
        %1061 = vxpose.xlu0.b32.cont [4/16] %v755, 128
        %1062 = vxpose.xlu0.b32.cont [5/16] %v760, 128
        %1063 = vxpose.xlu0.b32.cont [6/16] %v765, 128
        %1064 = vxpose.xlu0.b32.cont [7/16] %v770, 128
        %1065 = vxpose.xlu0.b32.cont [8/16] %v775, 128
        %1066 = vxpose.xlu0.b32.cont [9/16] %v780, 128
        %1067 = vxpose.xlu0.b32.cont [10/16] %v785, 128
        %1068 = vxpose.xlu0.b32.cont [11/16] %v790, 128
        %1069 = vxpose.xlu0.b32.cont [12/16] %v795, 128
        %1070 = vxpose.xlu0.b32.cont [13/16] %v800, 128
        %1071 = vxpose.xlu0.b32.cont [14/16] %v805, 128
        %1072 = vxpose.xlu0.b32.cont [15/16] %v810, 128
        %1073 = vxpose.xlu0.b32.end [16/16] %v815, 128
        %v1074 = vpop.trf.xlu0
        %v1075 = vpop.trf.xlu0
        %v1076 = vpop.trf.xlu0
        %v1077 = vpop.trf.xlu0
        %v1078 = vpop.trf.xlu0
        %v1079 = vpop.trf.xlu0
        %v1080 = vpop.trf.xlu0
        %v1081 = vpop.trf.xlu0
        %v1082 = vpop.trf.xlu0
        %v1083 = vpop.trf.xlu0
        %v1084 = vpop.trf.xlu0
        %v1085 = vpop.trf.xlu0
        %v1086 = vpop.trf.xlu0
        %v1087 = vpop.trf.xlu0
        %v1088 = vpop.trf.xlu0
        %v1089 = vpop.trf.xlu0
        %1090 = vxpose.xlu0.b32.start [1/16] %v820, 128
        %1091 = vxpose.xlu0.b32.cont [2/16] %v825, 128
        %1092 = vxpose.xlu0.b32.cont [3/16] %v830, 128
        %1093 = vxpose.xlu0.b32.cont [4/16] %v835, 128
        %1094 = vxpose.xlu0.b32.cont [5/16] %v840, 128
        %1095 = vxpose.xlu0.b32.cont [6/16] %v845, 128
        %1096 = vxpose.xlu0.b32.cont [7/16] %v850, 128
        %1097 = vxpose.xlu0.b32.cont [8/16] %v855, 128
        %1098 = vxpose.xlu0.b32.cont [9/16] %v860, 128
        %1099 = vxpose.xlu0.b32.cont [10/16] %v865, 128
        %1100 = vxpose.xlu0.b32.cont [11/16] %v870, 128
        %1101 = vxpose.xlu0.b32.cont [12/16] %v875, 128
        %1102 = vxpose.xlu0.b32.cont [13/16] %v880, 128
        %1103 = vxpose.xlu0.b32.cont [14/16] %v885, 128
        %1104 = vxpose.xlu0.b32.cont [15/16] %v890, 128
        %1105 = vxpose.xlu0.b32.end [16/16] %v895, 128
        %v1106 = vpop.trf.xlu0
        %v1107 = vpop.trf.xlu0
        %v1108 = vpop.trf.xlu0
        %v1109 = vpop.trf.xlu0
        %v1110 = vpop.trf.xlu0
        %v1111 = vpop.trf.xlu0
        %v1112 = vpop.trf.xlu0
        %v1113 = vpop.trf.xlu0
        %v1114 = vpop.trf.xlu0
        %v1115 = vpop.trf.xlu0
        %v1116 = vpop.trf.xlu0
        %v1117 = vpop.trf.xlu0
        %v1118 = vpop.trf.xlu0
        %v1119 = vpop.trf.xlu0
        %v1120 = vpop.trf.xlu0
        %v1121 = vpop.trf.xlu0
        %1122 = vxpose.xlu0.b32.start [1/16] %v900, 128
        %1123 = vxpose.xlu0.b32.cont [2/16] %v905, 128
        %1124 = vxpose.xlu0.b32.cont [3/16] %v910, 128
        %1125 = vxpose.xlu0.b32.cont [4/16] %v915, 128
        %1126 = vxpose.xlu0.b32.cont [5/16] %v920, 128
        %1127 = vxpose.xlu0.b32.cont [6/16] %v925, 128
        %1128 = vxpose.xlu0.b32.cont [7/16] %v930, 128
        %1129 = vxpose.xlu0.b32.cont [8/16] %v935, 128
        %1130 = vxpose.xlu0.b32.cont [9/16] %v940, 128
        %1131 = vxpose.xlu0.b32.cont [10/16] %v945, 128
        %1132 = vxpose.xlu0.b32.cont [11/16] %v950, 128
        %1133 = vxpose.xlu0.b32.cont [12/16] %v955, 128
        %1134 = vxpose.xlu0.b32.cont [13/16] %v960, 128
        %1135 = vxpose.xlu0.b32.cont [14/16] %v965, 128
        %1136 = vxpose.xlu0.b32.cont [15/16] %v970, 128
        %1137 = vxpose.xlu0.b32.end [16/16] %v975, 128
        %v1138 = vpop.trf.xlu0
        %v1139 = vpop.trf.xlu0
        %v1140 = vpop.trf.xlu0
        %v1141 = vpop.trf.xlu0
        %v1142 = vpop.trf.xlu0
        %v1143 = vpop.trf.xlu0
        %v1144 = vpop.trf.xlu0
        %v1145 = vpop.trf.xlu0
        %v1146 = vpop.trf.xlu0
        %v1147 = vpop.trf.xlu0
        %v1148 = vpop.trf.xlu0
        %v1149 = vpop.trf.xlu0
        %v1150 = vpop.trf.xlu0
        %v1151 = vpop.trf.xlu0
        %v1152 = vpop.trf.xlu0
        %v1153 = vpop.trf.xlu0
        %1154 = vxpose.xlu0.b32.start [1/16] %v980, 128
        %1155 = vxpose.xlu0.b32.cont [2/16] %v985, 128
        %1156 = vxpose.xlu0.b32.cont [3/16] %v990, 128
        %1157 = vxpose.xlu0.b32.cont [4/16] %v995, 128
        %1158 = vxpose.xlu0.b32.cont [5/16] %v1000, 128
        %1159 = vxpose.xlu0.b32.cont [6/16] %v1005, 128
        %1160 = vxpose.xlu0.b32.cont [7/16] %v1010, 128
        %1161 = vxpose.xlu0.b32.cont [8/16] %v1015, 128
        %1162 = vxpose.xlu0.b32.cont [9/16] %v1020, 128
        %1163 = vxpose.xlu0.b32.cont [10/16] %v1025, 128
        %1164 = vxpose.xlu0.b32.cont [11/16] %v1030, 128
        %1165 = vxpose.xlu0.b32.cont [12/16] %v1035, 128
        %1166 = vxpose.xlu0.b32.cont [13/16] %v1040, 128
        %1167 = vxpose.xlu0.b32.cont [14/16] %v1045, 128
        %1168 = vxpose.xlu0.b32.cont [15/16] %v1050, 128
        %1169 = vxpose.xlu0.b32.end [16/16] %v1055, 128
        %v1170 = vpop.trf.xlu0
        %v1171 = vpop.trf.xlu0
        %v1172 = vpop.trf.xlu0
        %v1173 = vpop.trf.xlu0
        %v1174 = vpop.trf.xlu0
        %v1175 = vpop.trf.xlu0
        %v1176 = vpop.trf.xlu0
        %v1177 = vpop.trf.xlu0
        %v1178 = vpop.trf.xlu0
        %v1179 = vpop.trf.xlu0
        %v1180 = vpop.trf.xlu0
        %v1181 = vpop.trf.xlu0
        %v1182 = vpop.trf.xlu0
        %v1183 = vpop.trf.xlu0
        %v1184 = vpop.trf.xlu0
        %v1185 = vpop.trf.xlu0
        %1186 = vst [vmem:[%s218] sm:$0xff] %v1074
        %1187 = vst [vmem:[%s218 + $0x8] sm:$0xff] %v1075
        %1188 = vst [vmem:[%s218 + $0x10] sm:$0xff] %v1076
        %1189 = vst [vmem:[%s218 + $0x18] sm:$0xff] %v1077
        %1190 = vst [vmem:[%s218 + $0x20] sm:$0xff] %v1078
        %1191 = vst [vmem:[%s218 + $0x28] sm:$0xff] %v1079
        %1192 = vst [vmem:[%s218 + $0x30] sm:$0xff] %v1080
        %1193 = vst [vmem:[%s218 + $0x38] sm:$0xff] %v1081
        %1194 = vst [vmem:[%s218 + $0x40] sm:$0xff] %v1106
        %1195 = vst [vmem:[%s218 + $0x48] sm:$0xff] %v1107
        %1196 = vst [vmem:[%s218 + $0x50] sm:$0xff] %v1108
        %1197 = vst [vmem:[%s218 + $0x58] sm:$0xff] %v1109
        %1198 = vst [vmem:[%s218 + $0x60] sm:$0xff] %v1110
        %1199 = vst [vmem:[%s218 + $0x68] sm:$0xff] %v1111
        %1200 = vst [vmem:[%s218 + $0x70] sm:$0xff] %v1112
        %1201 = vst [vmem:[%s218 + $0x78] sm:$0xff] %v1113
        %1202 = vst [vmem:[%s218 + $0x80] sm:$0xff] %v1138
        %1203 = vst [vmem:[%s218 + $0x88] sm:$0xff] %v1139
        %1204 = vst [vmem:[%s218 + $0x90] sm:$0xff] %v1140
        %1205 = vst [vmem:[%s218 + $0x98] sm:$0xff] %v1141
        %1206 = vst [vmem:[%s218 + $0xa0] sm:$0xff] %v1142
        %1207 = vst [vmem:[%s218 + $0xa8] sm:$0xff] %v1143
        %1208 = vst [vmem:[%s218 + $0xb0] sm:$0xff] %v1144
        %1209 = vst [vmem:[%s218 + $0xb8] sm:$0xff] %v1145
        %1210 = vst [vmem:[%s218 + $0xc0] sm:$0xff] %v1170
        %1211 = vst [vmem:[%s218 + $0xc8] sm:$0xff] %v1171
        %1212 = vst [vmem:[%s218 + $0xd0] sm:$0xff] %v1172
        %1213 = vst [vmem:[%s218 + $0xd8] sm:$0xff] %v1173
        %1214 = vst [vmem:[%s218 + $0xe0] sm:$0xff] %v1174
        %1215 = vst [vmem:[%s218 + $0xe8] sm:$0xff] %v1175
        %1216 = vst [vmem:[%s218 + $0xf0] sm:$0xff] %v1176
        %1217 = vst [vmem:[%s218 + $0xf8] sm:$0xff] %v1177
        %s1218 = sand.u32 %s97, 1
        %s1219 = scalar_lea.sflag [#allocation4], %s1218
        %s1220 = sand.u32 %s97, 1
        %s1221 = smul.addr %s1220, 256
        %s1222 = scalar_lea.vmem [#allocation8], %s1221
        // Predicated region
        $region45: #{tpu_custom_call.1} parent=31 // pred_check
          %p1223 = pneg %p107
        $region46: #{tpu_custom_call.1} parent=31 // pred_check_branch
          %1225 = sbr.rel (%p1223) target = $region48
        $region47: #{tpu_custom_call.1} parent=31 // pred_region
          %s1226 = smul.u32 4, %s21
          %s1228 = ssub.s32 4096, 4096
          %1229 = vsyncadd %s1219, %s1228
          %s1230 = smul.addr %s1226, 8
          %s1231 = smul.addr %s1230, 128
          %s1232 = scalar_lea.hbm %s3, %s1231
          %s1233 = sshll.u32 %s1222, 4
          %s1234 = int_to_ptr.vmem [resolvable:$true] %s1233
          %1239 = dma.vmem_to_hbm [thread:$0]  %s1234, 4096, %s1232, %s1219, 128, 128, 8
        $region48: #{tpu_custom_call.1} parent=31 // pred_fallthru
          _
      $region32: #{tpu_custom_call.1} parent=5 // pred_fallthru
        _
      %p1240 = scmp.le.s32.totalorder 2, %s16
      // Predicated region
      $region49: #{tpu_custom_call.1} parent=5 // pred_check
        %p1241 = pneg %p1240
      $region50: #{tpu_custom_call.1} parent=5 // pred_check_branch
        %1243 = sbr.rel (%p1241) target = $region52
      $region51: #{tpu_custom_call.1} parent=5 // pred_region
        %s1244 = ssub.s32 %s16, 2
        // Predicated region
        $region53: #{tpu_custom_call.1} parent=51 // pred_check
          %p1245 = pneg %p113
        $region54: #{tpu_custom_call.1} parent=51 // pred_check_branch
          %1247 = sbr.rel (%p1245) target = $region56
        $region55: #{tpu_custom_call.1} parent=51 // pred_region
          %s1248 = sand.u32 %s98, 1
          %s1249 = scalar_lea.sflag [#allocation4], %s1248
          %s1250 = sand.u32 %s98, 1
          %s1251 = smul.addr %s1250, 256
          %s1252 = scalar_lea.vmem [#allocation8], %s1251
          %1253 = dma.done %s1249, 4096
        $region56: #{tpu_custom_call.1} parent=51 // pred_fallthru
          _
      $region52: #{tpu_custom_call.1} parent=5 // pred_fallthru
        _
    $region6: #{tpu_custom_call.1} parent=1 // loop_footer
      %s20 = sadd.s32 1, %s16
    $region7: #{tpu_custom_call.1} parent=1 // loop_footer_branch
      %15 = sbr.rel target = $region3
    $region8: #{tpu_custom_call.1} parent=1 // loop_exit
      _
    %1254 = vsyncpa [#allocation3], 1
    %s1255 = scalar_lea.sflag [#allocation3], 1
    %1256 = vsyncpa %s1255, 1
    %1257 = vsyncpa [#allocation6], 1
    %1258 = vsyncpa [#allocation4], 1
    %s1259 = scalar_lea.sflag [#allocation4], 1
    %1260 = vsyncpa %s1259, 1

// kernel: tpu_custom_call.1
$region0: #{tpu_custom_call.1}
  #allocation0 [shape = 'u32[]', space=smem, size = 0x4, offset = 0x4, fixed_abs, tag = 'smem constant byte address 0x4 - core index']
  #allocation1 [shape = 'u32[144,128]{1,0:T(1,128)}', space=vmem, size = 0x12000, scoped, tag = 'internal scratch']
  %s0 = inlined_call_operand.hbm [shape: f32[8,16,128], index: 0, kind: input, shape index: {}]
  %s1 = inlined_call_operand.hbm [shape: f32[16,64], index: 1, kind: input, shape index: {}]
  %s2 = inlined_call_operand.hbm [shape: f32[128,128], index: 2, kind: input, shape index: {}]
  %s3 = inlined_call_operand.hbm [shape: f32[8,64,128], index: 3, kind: output, shape index: {}]
  %s4 = sld [smem:[#allocation0]]
  $region57: #{tpu_custom_call.1} parent=0
    _
  %s6 = ssub.s32 1, %s4
  %s7 = scalar_select 0, %s6, %s4
  $region1: #{tpu_custom_call.1} parent=0
    #allocation2 [shape = 'u8[65536]{0}', space=vmem, size = 0x10000, scoped, tag = 'input window, operand 0']
    #allocation3 [shape = 's32[2]{0}', space=sflag, size = 0x8, scoped, tag = 'scoped memory for tpu_custom_call.1']
    #allocation4 [shape = 's32[2]{0}', space=sflag, size = 0x8, scoped, tag = 'scoped memory for tpu_custom_call.1']
    #allocation5 [shape = 'u8[8192]{0}', space=vmem, size = 0x2000, scoped, tag = 'input window, operand 1, single buffered']
    #allocation6 [shape = 's32[1]{0}', space=sflag, size = 0x4, scoped, tag = 'scoped memory for tpu_custom_call.1']
    #allocation7 [shape = 'u8[65536]{0}', space=vmem, size = 0x10000, scoped, tag = 'input window, operand 2, single buffered']
    #allocation8 [shape = 'u8[262144]{0}', space=vmem, size = 0x40000, scoped, tag = 'output window, operand 0']
    %8 = vsyncpa [#allocation3], 0
    %s9 = scalar_lea.sflag [#allocation3], 1
    %10 = vsyncpa %s9, 0
    %11 = vsyncpa [#allocation6], 0
    %12 = vsyncpa [#allocation4], 0
    %s13 = scalar_lea.sflag [#allocation4], 1
    %14 = vsyncpa %s13, 0
    loop: start=0, step=1, limit=4
    $region2: #{tpu_custom_call.1} parent=1 // loop_pre_header
      _
    $region3: #{tpu_custom_call.1} parent=1 // loop_header
      %s16 = sphi 0, %s20
      %p17 = scmp.ge.s32.totalorder %s16, 4
      %s26 = sphi 0, %s28
      %s29 = sphi 0, %s26
      %s30 = sphi 0, %s29
      %s46 = sphi 0, %s30
      %s50 = sphi 0, %s50
      %s52 = sphi 0, %s50
      %s53 = sphi 0, %s52
      %s67 = sphi 0, %s53
      %s71 = sphi 0, %s71
      %s73 = sphi 0, %s71
      %s74 = sphi 0, %s73
      %s88 = sphi 0, %s74
      %s94 = sphi 0, %s96
      %s97 = sphi 0, %s94
      %s98 = sphi 0, %s97
      %s114 = sphi 0, %s98
    $region4: #{tpu_custom_call.1} parent=1 // loop_header_branch
      %19 = sbr.rel (%p17) target = $region8
    $region5: #{tpu_custom_call.1} parent=1 // loop_body
      %s21 = ssub.s32 %s16, 1
      %s22 = ssub.s32 %s16, 2
      %s23 = sadd.s32 %s16, 1
      %s24 = ssub.s32 %s16, %s23
      %p25 = scmp.eq.s32.totalorder %s24, 0
      %s27 = sadd.s32 %s26, 1
      %s28 = scalar_select %p25, %s26, %s27
      %p31 = pneg %p25
      %p32 = scmp.eq.s32.totalorder %s16, 1
      %p33 = por %p31, %p32
      %p34 = scmp.ne.s32.totalorder %s26, %s29
      %p35 = scmp.eq.s32.totalorder %s16, 0
      %p36 = por %p34, %p35
      %p37 = scmp.ne.s32.totalorder %s26, %s29
      %p38 = scmp.eq.s32.totalorder %s21, 1
      %p39 = por %p37, %p38
      %p40 = scmp.ne.s32.totalorder %s29, %s30
      %p41 = scmp.eq.s32.totalorder %s21, 0
      %p42 = por %p40, %p41
      %p43 = scmp.ne.s32.totalorder %s29, %s30
      %p44 = scmp.eq.s32.totalorder %s22, 1
      %p45 = por %p43, %p44
      %p47 = scmp.ne.s32.totalorder %s30, %s46
      %p48 = scmp.eq.s32.totalorder %s22, 0
      %p49 = por %p47, %p48
      %s51 = sadd.s32 %s50, 1
      %p54 = scmp.eq.s32.totalorder %s16, 1
      %p55 = scmp.ne.s32.totalorder %s50, %s52
      %p56 = scmp.eq.s32.totalorder %s16, 0
      %p57 = por %p55, %p56
      %p58 = scmp.ne.s32.totalorder %s50, %s52
      %p59 = scmp.eq.s32.totalorder %s21, 1
      %p60 = por %p58, %p59
      %p61 = scmp.ne.s32.totalorder %s52, %s53
      %p62 = scmp.eq.s32.totalorder %s21, 0
      %p63 = por %p61, %p62
      %p64 = scmp.ne.s32.totalorder %s52, %s53
      %p65 = scmp.eq.s32.totalorder %s22, 1
      %p66 = por %p64, %p65
      %p68 = scmp.ne.s32.totalorder %s53, %s67
      %p69 = scmp.eq.s32.totalorder %s22, 0
      %p70 = por %p68, %p69
      %s72 = sadd.s32 %s71, 1
      %p75 = scmp.eq.s32.totalorder %s16, 1
      %p76 = scmp.ne.s32.totalorder %s71, %s73
      %p77 = scmp.eq.s32.totalorder %s16, 0
      %p78 = por %p76, %p77
      %p79 = scmp.ne.s32.totalorder %s71, %s73
      %p80 = scmp.eq.s32.totalorder %s21, 1
      %p81 = por %p79, %p80
      %p82 = scmp.ne.s32.totalorder %s73, %s74
      %p83 = scmp.eq.s32.totalorder %s21, 0
      %p84 = por %p82, %p83
      %p85 = scmp.ne.s32.totalorder %s73, %s74
      %p86 = scmp.eq.s32.totalorder %s22, 1
      %p87 = por %p85, %p86
      %p89 = scmp.ne.s32.totalorder %s74, %s88
      %p90 = scmp.eq.s32.totalorder %s22, 0
      %p91 = por %p89, %p90
      %s92 = ssub.s32 %s16, %s23
      %p93 = scmp.eq.s32.totalorder %s92, 0
      %s95 = sadd.s32 %s94, 1
      %s96 = scalar_select %p93, %s94, %s95
      %p99 = pneg %p93
      %p100 = scmp.eq.s32.totalorder %s16, 1
      %p101 = por %p99, %p100
      %p102 = scmp.ne.s32.totalorder %s94, %s97
      %p103 = scmp.eq.s32.totalorder %s16, 0
      %p104 = por %p102, %p103
      %p105 = scmp.ne.s32.totalorder %s94, %s97
      %p106 = scmp.eq.s32.totalorder %s21, 1
      %p107 = por %p105, %p106
      %p108 = scmp.ne.s32.totalorder %s97, %s98
      %p109 = scmp.eq.s32.totalorder %s21, 0
      %p110 = por %p108, %p109
      %p111 = scmp.ne.s32.totalorder %s97, %s98
      %p112 = scmp.eq.s32.totalorder %s22, 1
      %p113 = por %p111, %p112
      %p115 = scmp.ne.s32.totalorder %s98, %s114
      %p116 = scmp.eq.s32.totalorder %s22, 0
      %p117 = por %p115, %p116
      %p118 = scmp.le.s32.totalorder 1, %s16
      %p119 = scmp.lt.s32.totalorder %s16, 3
      %p120 = pnand %p118, %p119
      %p121 = pneg %p120
      // Predicated region
      $region9: #{tpu_custom_call.1} parent=5 // pred_check
        _
      $region10: #{tpu_custom_call.1} parent=5 // pred_check_branch
        %123 = sbr.rel (%p120) target = $region12
      $region11: #{tpu_custom_call.1} parent=5 // pred_region
        %s124 = ssub.s32 %s16, 1
        // Predicated region
        $region13: #{tpu_custom_call.1} parent=11 // pred_check
          %p125 = pneg %p63
        $region14: #{tpu_custom_call.1} parent=11 // pred_check_branch
          %127 = sbr.rel (%p125) target = $region16
        $region15: #{tpu_custom_call.1} parent=11 // pred_region
          %s129 = ssub.s32 256, 256
          %130 = vsyncadd [#allocation6], %s129
          %s131 = sshll.u32 [#allocation5], 4
          %s132 = int_to_ptr.vmem [resolvable:$true] %s131
          %137 = dma.hbm_to_vmem [thread:$0]  %s1, 256, %s132, [#allocation6], 128, 128, 8
        $region16: #{tpu_custom_call.1} parent=11 // pred_fallthru
          _
        // Predicated region
        $region17: #{tpu_custom_call.1} parent=11 // pred_check
          %p138 = pneg %p84
        $region18: #{tpu_custom_call.1} parent=11 // pred_check_branch
          %140 = sbr.rel (%p138) target = $region20
        $region19: #{tpu_custom_call.1} parent=11 // pred_region
          %s142 = ssub.s32 2048, 2048
          %143 = vsyncadd [#allocation6], %s142
          %s144 = sshll.u32 [#allocation7], 4
          %s145 = int_to_ptr.vmem [resolvable:$true] %s144
          %150 = dma.hbm_to_vmem [thread:$0]  %s2, 2048, %s145, [#allocation6], 128, 128, 8
        $region20: #{tpu_custom_call.1} parent=11 // pred_fallthru
          _
      $region12: #{tpu_custom_call.1} parent=5 // pred_fallthru
        _
      %p151 = scmp.lt.s32.totalorder %s16, 2
      // Predicated region
      $region21: #{tpu_custom_call.1} parent=5 // pred_check
        %p152 = pneg %p151
      $region22: #{tpu_custom_call.1} parent=5 // pred_check_branch
        %154 = sbr.rel (%p152) target = $region24
      $region23: #{tpu_custom_call.1} parent=5 // pred_region
        // Predicated region
        $region25: #{tpu_custom_call.1} parent=23 // pred_check
          %p155 = pneg %p36
        $region26: #{tpu_custom_call.1} parent=23 // pred_check_branch
          %157 = sbr.rel (%p155) target = $region28
        $region27: #{tpu_custom_call.1} parent=23 // pred_region
          %s158 = sand.u32 %s26, 1
          %s159 = scalar_lea.sflag [#allocation3], %s158
          %s160 = sand.u32 %s26, 1
          %s161 = smul.addr %s160, 64
          %s162 = scalar_lea.vmem [#allocation2], %s161
          %s163 = smul.u32 4, %s16
          %s165 = ssub.s32 1024, 1024
          %166 = vsyncadd %s159, %s165
          %s167 = smul.addr %s163, 2
          %s168 = smul.addr %s167, 128
          %s169 = scalar_lea.hbm %s0, %s168
          %s170 = sshll.u32 %s162, 4
          %s171 = int_to_ptr.vmem [resolvable:$true] %s170
          %176 = dma.hbm_to_vmem [thread:$0]  %s169, 1024, %s171, %s159, 128, 128, 8
        $region28: #{tpu_custom_call.1} parent=23 // pred_fallthru
          _
      $region24: #{tpu_custom_call.1} parent=5 // pred_fallthru
        _
      %p177 = scmp.le.s32.totalorder 1, %s16
      %p178 = scmp.lt.s32.totalorder %s16, 3
      %p179 = pnand %p177, %p178
      %p180 = pneg %p179
      // Predicated region
      $region29: #{tpu_custom_call.1} parent=5 // pred_check
        _
      $region30: #{tpu_custom_call.1} parent=5 // pred_check_branch
        %182 = sbr.rel (%p179) target = $region32
      $region31: #{tpu_custom_call.1} parent=5 // pred_region
        %s183 = ssub.s32 %s16, 1
        %s184 = sand.u32 %s29, 1
        %s185 = scalar_lea.sflag [#allocation3], %s184
        %s186 = sand.u32 %s29, 1
        %s187 = smul.addr %s186, 64
        %s188 = scalar_lea.vmem [#allocation2], %s187
        // Predicated region
        $region33: #{tpu_custom_call.1} parent=31 // pred_check
          %p189 = pneg %p42
        $region34: #{tpu_custom_call.1} parent=31 // pred_check_branch
          %191 = sbr.rel (%p189) target = $region36
        $region35: #{tpu_custom_call.1} parent=31 // pred_region
          %192 = dma.done %s185, 1024
        $region36: #{tpu_custom_call.1} parent=31 // pred_fallthru
          _
        // Predicated region
        $region37: #{tpu_custom_call.1} parent=31 // pred_check
          %p193 = pneg %p63
        $region38: #{tpu_custom_call.1} parent=31 // pred_check_branch
          %195 = sbr.rel (%p193) target = $region40
        $region39: #{tpu_custom_call.1} parent=31 // pred_region
          %196 = dma.done [#allocation6], 256
        $region40: #{tpu_custom_call.1} parent=31 // pred_fallthru
          _
        // Predicated region
        $region41: #{tpu_custom_call.1} parent=31 // pred_check
          %p197 = pneg %p84
        $region42: #{tpu_custom_call.1} parent=31 // pred_check_branch
          %199 = sbr.rel (%p197) target = $region44
        $region43: #{tpu_custom_call.1} parent=31 // pred_region
          %200 = dma.done [#allocation6], 2048
        $region44: #{tpu_custom_call.1} parent=31 // pred_fallthru
          _
        %s201 = sand.u32 %s29, 1
        %s202 = scalar_lea.sflag [#allocation3], %s201
        %s203 = sand.u32 %s29, 1
        %s204 = smul.addr %s203, 64
        %s205 = scalar_lea.vmem [#allocation2], %s204
        %p206 = pneg %p42
        %p207 = pneg %p39
        %p208 = pneg %p63
        %p209 = pneg %p60
        %p210 = pneg %p84
        %p211 = pneg %p81
        %p212 = pneg %p110
        %p213 = pneg %p107
        %s214 = sand.u32 %s97, 1
        %s215 = scalar_lea.sflag [#allocation4], %s214
        %s216 = sand.u32 %s97, 1
        %s217 = smul.addr %s216, 256
        %s218 = scalar_lea.vmem [#allocation8], %s217
        %s219 = smul.u32 4, %s21
        %s220 = smul.u32 4, %s21
        %v221 = vld [vmem:[%s188] sm:$0xff]
        %v222 = vld [vmem:[%s188 + $0x8] sm:$0xff]
        %v223 = vld [vmem:[%s188 + $0x10] sm:$0xff]
        %v224 = vld [vmem:[%s188 + $0x18] sm:$0xff]
        %v225 = vld [vmem:[%s188 + $0x20] sm:$0xff]
        %v226 = vld [vmem:[%s188 + $0x28] sm:$0xff]
        %v227 = vld [vmem:[%s188 + $0x30] sm:$0xff]
        %v228 = vld [vmem:[%s188 + $0x38] sm:$0xff]
        %v229 = vld [vmem:[#allocation7] sm:$0xff]
        %v230 = vld [vmem:[#allocation7 + $0x8] sm:$0xff]
        %v231 = vld [vmem:[#allocation7 + $0x10] sm:$0xff]
        %v232 = vld [vmem:[#allocation7 + $0x18] sm:$0xff]
        %v233 = vld [vmem:[#allocation7 + $0x20] sm:$0xff]
        %v234 = vld [vmem:[#allocation7 + $0x28] sm:$0xff]
        %v235 = vld [vmem:[#allocation7 + $0x30] sm:$0xff]
        %v236 = vld [vmem:[#allocation7 + $0x38] sm:$0xff]
        %v237 = vld [vmem:[#allocation7 + $0x40] sm:$0xff]
        %v238 = vld [vmem:[#allocation7 + $0x48] sm:$0xff]
        %v239 = vld [vmem:[#allocation7 + $0x50] sm:$0xff]
        %v240 = vld [vmem:[#allocation7 + $0x58] sm:$0xff]
        %v241 = vld [vmem:[#allocation7 + $0x60] sm:$0xff]
        %v242 = vld [vmem:[#allocation7 + $0x68] sm:$0xff]
        %v243 = vld [vmem:[#allocation7 + $0x70] sm:$0xff]
        %v244 = vld [vmem:[#allocation7 + $0x78] sm:$0xff]
        %245 = vmatprep.subr.mxu0 0.0
        %246 = vmatpush1.msra.mxu0 %v229
        %247 = vmatprep.subr.mxu0 0.0
        %248 = vmatpush1.msra.mxu0 %v230
        %249 = vmatprep.subr.mxu0 0.0
        %250 = vmatpush1.msra.mxu0 %v231
        %251 = vmatprep.subr.mxu0 0.0
        %252 = vmatpush1.msra.mxu0 %v232
        %253 = vmatprep.subr.mxu0 0.0
        %254 = vmatpush1.msra.mxu0 %v233
        %255 = vmatprep.subr.mxu0 0.0
        %256 = vmatpush1.msra.mxu0 %v234
        %257 = vmatprep.subr.mxu0 0.0
        %258 = vmatpush1.msra.mxu0 %v235
        %259 = vmatprep.subr.mxu0 0.0
        %260 = vmatpush1.msra.mxu0 %v236
        %261 = vmatprep.subr.mxu0 0.0
        %262 = vmatpush1.msra.mxu0 %v237
        %263 = vmatprep.subr.mxu0 0.0
        %264 = vmatpush1.msra.mxu0 %v238
        %265 = vmatprep.subr.mxu0 0.0
        %266 = vmatpush1.msra.mxu0 %v239
        %267 = vmatprep.subr.mxu0 0.0
        %268 = vmatpush1.msra.mxu0 %v240
        %269 = vmatprep.subr.mxu0 0.0
        %270 = vmatpush1.msra.mxu0 %v241
        %271 = vmatprep.subr.mxu0 0.0
        %272 = vmatpush1.msra.mxu0 %v242
        %273 = vmatprep.subr.mxu0 0.0
        %274 = vmatpush1.msra.mxu0 %v243
        %275 = vmatprep.subr.mxu0 0.0
        %276 = vmatpush1.msra.mxu0 %v244
        %277 = vmatprep.subr.mxu0 0.0
        %278 = vmatpush1.msra.mxu0 0.0
        %279 = vmatprep.subr.mxu0 0.0
        %280 = vmatpush1.msra.mxu0 0.0
        %281 = vmatprep.subr.mxu0 0.0
        %282 = vmatpush1.msra.mxu0 0.0
        %283 = vmatprep.subr.mxu0 0.0
        %284 = vmatpush1.msra.mxu0 0.0
        %285 = vmatprep.subr.mxu0 0.0
        %286 = vmatpush1.msra.mxu0 0.0
        %287 = vmatprep.subr.mxu0 0.0
        %288 = vmatpush1.msra.mxu0 0.0
        %289 = vmatprep.subr.mxu0 0.0
        %290 = vmatpush1.msra.mxu0 0.0
        %291 = vmatprep.subr.mxu0 0.0
        %292 = vmatpush1.msra.mxu0 0.0
        %293 = vmatprep.subr.mxu0 0.0
        %294 = vmatpush1.msra.mxu0 0.0
        %295 = vmatprep.subr.mxu0 0.0
        %296 = vmatpush1.msra.mxu0 0.0
        %297 = vmatprep.subr.mxu0 0.0
        %298 = vmatpush1.msra.mxu0 0.0
        %299 = vmatprep.subr.mxu0 0.0
        %300 = vmatpush1.msra.mxu0 0.0
        %301 = vmatprep.subr.mxu0 0.0
        %302 = vmatpush1.msra.mxu0 0.0
        %303 = vmatprep.subr.mxu0 0.0
        %304 = vmatpush1.msra.mxu0 0.0
        %305 = vmatprep.subr.mxu0 0.0
        %306 = vmatpush1.msra.mxu0 0.0
        %307 = vmatprep.subr.mxu0 0.0
        %308 = vmatpush1.msra.mxu0 0.0
        %309 = vmatprep.mubr.f32.mxu0 0.0
        %310 = vmatmul.mubr.f32.gmra.mrb[0].mxu0 %v221
        %v311 = vpop.f32.mrb[0].mxu0
        %v312 = vadd.f32 0.0, %v311
        %v313 = vpop.f32.mrb[0].mxu0
        %314 = vmatprep.mubr.f32.mxu0 0.0
        %315 = vmatmul.mubr.f32.gmra.mrb[0].mxu0 %v222
        %v316 = vpop.f32.mrb[0].mxu0
        %v317 = vadd.f32 0.0, %v316
        %v318 = vpop.f32.mrb[0].mxu0
        %319 = vmatprep.mubr.f32.mxu0 0.0
        %320 = vmatmul.mubr.f32.gmra.mrb[0].mxu0 %v223
        %v321 = vpop.f32.mrb[0].mxu0
        %v322 = vadd.f32 0.0, %v321
        %v323 = vpop.f32.mrb[0].mxu0
        %324 = vmatprep.mubr.f32.mxu0 0.0
        %325 = vmatmul.mubr.f32.gmra.mrb[0].mxu0 %v224
        %v326 = vpop.f32.mrb[0].mxu0
        %v327 = vadd.f32 0.0, %v326
        %v328 = vpop.f32.mrb[0].mxu0
        %329 = vmatprep.mubr.f32.mxu0 0.0
        %330 = vmatmul.mubr.f32.gmra.mrb[0].mxu0 %v225
        %v331 = vpop.f32.mrb[0].mxu0
        %v332 = vadd.f32 0.0, %v331
        %v333 = vpop.f32.mrb[0].mxu0
        %334 = vmatprep.mubr.f32.mxu0 0.0
        %335 = vmatmul.mubr.f32.gmra.mrb[0].mxu0 %v226
        %v336 = vpop.f32.mrb[0].mxu0
        %v337 = vadd.f32 0.0, %v336
        %v338 = vpop.f32.mrb[0].mxu0
        %339 = vmatprep.mubr.f32.mxu0 0.0
        %340 = vmatmul.mubr.f32.gmra.mrb[0].mxu0 %v227
        %v341 = vpop.f32.mrb[0].mxu0
        %v342 = vadd.f32 0.0, %v341
        %v343 = vpop.f32.mrb[0].mxu0
        %344 = vmatprep.mubr.f32.mxu0 0.0
        %345 = vmatmul.mubr.f32.gmra.mrb[0].mxu0 %v228
        %v346 = vpop.f32.mrb[0].mxu0
        %v347 = vadd.f32 0.0, %v346
        %v348 = vpop.f32.mrb[0].mxu0
        %349 = vdwg.mxu0
        %350 = vxpose.xlu0.b32.start [1/16] %v312, 128
        %351 = vxpose.xlu0.b32.cont [2/16] %v317, 128
        %352 = vxpose.xlu0.b32.cont [3/16] 0.0, 128
        %353 = vxpose.xlu0.b32.cont [4/16] 0.0, 128
        %354 = vxpose.xlu0.b32.cont [5/16] 0.0, 128
        %355 = vxpose.xlu0.b32.cont [6/16] 0.0, 128
        %356 = vxpose.xlu0.b32.cont [7/16] 0.0, 128
        %357 = vxpose.xlu0.b32.cont [8/16] 0.0, 128
        %358 = vxpose.xlu0.b32.cont [9/16] 0.0, 128
        %359 = vxpose.xlu0.b32.cont [10/16] 0.0, 128
        %360 = vxpose.xlu0.b32.cont [11/16] 0.0, 128
        %361 = vxpose.xlu0.b32.cont [12/16] 0.0, 128
        %362 = vxpose.xlu0.b32.cont [13/16] 0.0, 128
        %363 = vxpose.xlu0.b32.cont [14/16] 0.0, 128
        %364 = vxpose.xlu0.b32.cont [15/16] 0.0, 128
        %365 = vxpose.xlu0.b32.end [16/16] 0.0, 128
        %v366 = vpop.trf.xlu0
        %v367 = vpop.trf.xlu0
        %v368 = vpop.trf.xlu0
        %v369 = vpop.trf.xlu0
        %v370 = vpop.trf.xlu0
        %v371 = vpop.trf.xlu0
        %v372 = vpop.trf.xlu0
        %v373 = vpop.trf.xlu0
        %v374 = vpop.trf.xlu0
        %v375 = vpop.trf.xlu0
        %v376 = vpop.trf.xlu0
        %v377 = vpop.trf.xlu0
        %v378 = vpop.trf.xlu0
        %v379 = vpop.trf.xlu0
        %v380 = vpop.trf.xlu0
        %v381 = vpop.trf.xlu0
        %382 = vxpose.xlu0.b32.start [1/16] %v322, 128
        %383 = vxpose.xlu0.b32.cont [2/16] %v327, 128
        %384 = vxpose.xlu0.b32.cont [3/16] 0.0, 128
        %385 = vxpose.xlu0.b32.cont [4/16] 0.0, 128
        %386 = vxpose.xlu0.b32.cont [5/16] 0.0, 128
        %387 = vxpose.xlu0.b32.cont [6/16] 0.0, 128
        %388 = vxpose.xlu0.b32.cont [7/16] 0.0, 128
        %389 = vxpose.xlu0.b32.cont [8/16] 0.0, 128
        %390 = vxpose.xlu0.b32.cont [9/16] 0.0, 128
        %391 = vxpose.xlu0.b32.cont [10/16] 0.0, 128
        %392 = vxpose.xlu0.b32.cont [11/16] 0.0, 128
        %393 = vxpose.xlu0.b32.cont [12/16] 0.0, 128
        %394 = vxpose.xlu0.b32.cont [13/16] 0.0, 128
        %395 = vxpose.xlu0.b32.cont [14/16] 0.0, 128
        %396 = vxpose.xlu0.b32.cont [15/16] 0.0, 128
        %397 = vxpose.xlu0.b32.end [16/16] 0.0, 128
        %v398 = vpop.trf.xlu0
        %v399 = vpop.trf.xlu0
        %v400 = vpop.trf.xlu0
        %v401 = vpop.trf.xlu0
        %v402 = vpop.trf.xlu0
        %v403 = vpop.trf.xlu0
        %v404 = vpop.trf.xlu0
        %v405 = vpop.trf.xlu0
        %v406 = vpop.trf.xlu0
        %v407 = vpop.trf.xlu0
        %v408 = vpop.trf.xlu0
        %v409 = vpop.trf.xlu0
        %v410 = vpop.trf.xlu0
        %v411 = vpop.trf.xlu0
        %v412 = vpop.trf.xlu0
        %v413 = vpop.trf.xlu0
        %414 = vxpose.xlu0.b32.start [1/16] %v332, 128
        %415 = vxpose.xlu0.b32.cont [2/16] %v337, 128
        %416 = vxpose.xlu0.b32.cont [3/16] 0.0, 128
        %417 = vxpose.xlu0.b32.cont [4/16] 0.0, 128
        %418 = vxpose.xlu0.b32.cont [5/16] 0.0, 128
        %419 = vxpose.xlu0.b32.cont [6/16] 0.0, 128
        %420 = vxpose.xlu0.b32.cont [7/16] 0.0, 128
        %421 = vxpose.xlu0.b32.cont [8/16] 0.0, 128
        %422 = vxpose.xlu0.b32.cont [9/16] 0.0, 128
        %423 = vxpose.xlu0.b32.cont [10/16] 0.0, 128
        %424 = vxpose.xlu0.b32.cont [11/16] 0.0, 128
        %425 = vxpose.xlu0.b32.cont [12/16] 0.0, 128
        %426 = vxpose.xlu0.b32.cont [13/16] 0.0, 128
        %427 = vxpose.xlu0.b32.cont [14/16] 0.0, 128
        %428 = vxpose.xlu0.b32.cont [15/16] 0.0, 128
        %429 = vxpose.xlu0.b32.end [16/16] 0.0, 128
        %v430 = vpop.trf.xlu0
        %v431 = vpop.trf.xlu0
        %v432 = vpop.trf.xlu0
        %v433 = vpop.trf.xlu0
        %v434 = vpop.trf.xlu0
        %v435 = vpop.trf.xlu0
        %v436 = vpop.trf.xlu0
        %v437 = vpop.trf.xlu0
        %v438 = vpop.trf.xlu0
        %v439 = vpop.trf.xlu0
        %v440 = vpop.trf.xlu0
        %v441 = vpop.trf.xlu0
        %v442 = vpop.trf.xlu0
        %v443 = vpop.trf.xlu0
        %v444 = vpop.trf.xlu0
        %v445 = vpop.trf.xlu0
        %446 = vxpose.xlu0.b32.start [1/16] %v342, 128
        %447 = vxpose.xlu0.b32.cont [2/16] %v347, 128
        %448 = vxpose.xlu0.b32.cont [3/16] 0.0, 128
        %449 = vxpose.xlu0.b32.cont [4/16] 0.0, 128
        %450 = vxpose.xlu0.b32.cont [5/16] 0.0, 128
        %451 = vxpose.xlu0.b32.cont [6/16] 0.0, 128
        %452 = vxpose.xlu0.b32.cont [7/16] 0.0, 128
        %453 = vxpose.xlu0.b32.cont [8/16] 0.0, 128
        %454 = vxpose.xlu0.b32.cont [9/16] 0.0, 128
        %455 = vxpose.xlu0.b32.cont [10/16] 0.0, 128
        %456 = vxpose.xlu0.b32.cont [11/16] 0.0, 128
        %457 = vxpose.xlu0.b32.cont [12/16] 0.0, 128
        %458 = vxpose.xlu0.b32.cont [13/16] 0.0, 128
        %459 = vxpose.xlu0.b32.cont [14/16] 0.0, 128
        %460 = vxpose.xlu0.b32.cont [15/16] 0.0, 128
        %461 = vxpose.xlu0.b32.end [16/16] 0.0, 128
        %v462 = vpop.trf.xlu0
        %v463 = vpop.trf.xlu0
        %v464 = vpop.trf.xlu0
        %v465 = vpop.trf.xlu0
        %v466 = vpop.trf.xlu0
        %v467 = vpop.trf.xlu0
        %v468 = vpop.trf.xlu0
        %v469 = vpop.trf.xlu0
        %v470 = vpop.trf.xlu0
        %v471 = vpop.trf.xlu0
        %v472 = vpop.trf.xlu0
        %v473 = vpop.trf.xlu0
        %v474 = vpop.trf.xlu0
        %v475 = vpop.trf.xlu0
        %v476 = vpop.trf.xlu0
        %v477 = vpop.trf.xlu0
        %v478 = vld [vmem:[#allocation5] sm:$0xff]
        %v479 = vld [vmem:[#allocation5 + $0x8] sm:$0xff]
        %vm480 = vcmask 130048
        %v482 = vsel %vm480, %v366, 0
        %v485 = vsel %vm480, %v367, 0
        %v488 = vsel %vm480, %v368, 0
        %v491 = vsel %vm480, %v369, 0
        %v494 = vsel %vm480, %v370, 0
        %v497 = vsel %vm480, %v371, 0
        %v500 = vsel %vm480, %v372, 0
        %v503 = vsel %vm480, %v373, 0
        %v506 = vsel %vm480, %v374, 0
        %v509 = vsel %vm480, %v375, 0
        %v512 = vsel %vm480, %v376, 0
        %v515 = vsel %vm480, %v377, 0
        %v518 = vsel %vm480, %v378, 0
        %v521 = vsel %vm480, %v379, 0
        %v524 = vsel %vm480, %v380, 0
        %v527 = vsel %vm480, %v381, 0
        %v530 = vsel %vm480, %v398, 0
        %v533 = vsel %vm480, %v399, 0
        %v536 = vsel %vm480, %v400, 0
        %v539 = vsel %vm480, %v401, 0
        %v542 = vsel %vm480, %v402, 0
        %v545 = vsel %vm480, %v403, 0
        %v548 = vsel %vm480, %v404, 0
        %v551 = vsel %vm480, %v405, 0
        %v554 = vsel %vm480, %v406, 0
        %v557 = vsel %vm480, %v407, 0
        %v560 = vsel %vm480, %v408, 0
        %v563 = vsel %vm480, %v409, 0
        %v566 = vsel %vm480, %v410, 0
        %v569 = vsel %vm480, %v411, 0
        %v572 = vsel %vm480, %v412, 0
        %v575 = vsel %vm480, %v413, 0
        %v578 = vsel %vm480, %v430, 0
        %v581 = vsel %vm480, %v431, 0
        %v584 = vsel %vm480, %v432, 0
        %v587 = vsel %vm480, %v433, 0
        %v590 = vsel %vm480, %v434, 0
        %v593 = vsel %vm480, %v435, 0
        %v596 = vsel %vm480, %v436, 0
        %v599 = vsel %vm480, %v437, 0
        %v602 = vsel %vm480, %v438, 0
        %v605 = vsel %vm480, %v439, 0
        %v608 = vsel %vm480, %v440, 0
        %v611 = vsel %vm480, %v441, 0
        %v614 = vsel %vm480, %v442, 0
        %v617 = vsel %vm480, %v443, 0
        %v620 = vsel %vm480, %v444, 0
        %v623 = vsel %vm480, %v445, 0
        %v626 = vsel %vm480, %v462, 0
        %v629 = vsel %vm480, %v463, 0
        %v632 = vsel %vm480, %v464, 0
        %v635 = vsel %vm480, %v465, 0
        %v638 = vsel %vm480, %v466, 0
        %v641 = vsel %vm480, %v467, 0
        %v644 = vsel %vm480, %v468, 0
        %v647 = vsel %vm480, %v469, 0
        %v650 = vsel %vm480, %v470, 0
        %v653 = vsel %vm480, %v471, 0
        %v656 = vsel %vm480, %v472, 0
        %v659 = vsel %vm480, %v473, 0
        %v662 = vsel %vm480, %v474, 0
        %v665 = vsel %vm480, %v475, 0
        %v668 = vsel %vm480, %v476, 0
        %v671 = vsel %vm480, %v477, 0
        %673 = vmatprep.subr.mxu0 0.0
        %674 = vmatpush1.msra.mxu0 %v478
        %675 = vmatprep.subr.mxu0 0.0
        %676 = vmatpush1.msra.mxu0 %v479
        %677 = vmatprep.subr.mxu0 0.0
        %678 = vmatpush1.msra.mxu0 0.0
        %679 = vmatprep.subr.mxu0 0.0
        %680 = vmatpush1.msra.mxu0 0.0
        %681 = vmatprep.subr.mxu0 0.0
        %682 = vmatpush1.msra.mxu0 0.0
        %683 = vmatprep.subr.mxu0 0.0
        %684 = vmatpush1.msra.mxu0 0.0
        %685 = vmatprep.subr.mxu0 0.0
        %686 = vmatpush1.msra.mxu0 0.0
        %687 = vmatprep.subr.mxu0 0.0
        %688 = vmatpush1.msra.mxu0 0.0
        %689 = vmatprep.subr.mxu0 0.0
        %690 = vmatpush1.msra.mxu0 0.0
        %691 = vmatprep.subr.mxu0 0.0
        %692 = vmatpush1.msra.mxu0 0.0
        %693 = vmatprep.subr.mxu0 0.0
        %694 = vmatpush1.msra.mxu0 0.0
        %695 = vmatprep.subr.mxu0 0.0
        %696 = vmatpush1.msra.mxu0 0.0
        %697 = vmatprep.subr.mxu0 0.0
        %698 = vmatpush1.msra.mxu0 0.0
        %699 = vmatprep.subr.mxu0 0.0
        %700 = vmatpush1.msra.mxu0 0.0
        %701 = vmatprep.subr.mxu0 0.0
        %702 = vmatpush1.msra.mxu0 0.0
        %703 = vmatprep.subr.mxu0 0.0
        %704 = vmatpush1.msra.mxu0 0.0
        %705 = vmatprep.subr.mxu0 0.0
        %706 = vmatpush1.msra.mxu0 0.0
        %707 = vmatprep.subr.mxu0 0.0
        %708 = vmatpush1.msra.mxu0 0.0
        %709 = vmatprep.subr.mxu0 0.0
        %710 = vmatpush1.msra.mxu0 0.0
        %711 = vmatprep.subr.mxu0 0.0
        %712 = vmatpush1.msra.mxu0 0.0
        %713 = vmatprep.subr.mxu0 0.0
        %714 = vmatpush1.msra.mxu0 0.0
        %715 = vmatprep.subr.mxu0 0.0
        %716 = vmatpush1.msra.mxu0 0.0
        %717 = vmatprep.subr.mxu0 0.0
        %718 = vmatpush1.msra.mxu0 0.0
        %719 = vmatprep.subr.mxu0 0.0
        %720 = vmatpush1.msra.mxu0 0.0
        %721 = vmatprep.subr.mxu0 0.0
        %722 = vmatpush1.msra.mxu0 0.0
        %723 = vmatprep.subr.mxu0 0.0
        %724 = vmatpush1.msra.mxu0 0.0
        %725 = vmatprep.subr.mxu0 0.0
        %726 = vmatpush1.msra.mxu0 0.0
        %727 = vmatprep.subr.mxu0 0.0
        %728 = vmatpush1.msra.mxu0 0.0
        %729 = vmatprep.subr.mxu0 0.0
        %730 = vmatpush1.msra.mxu0 0.0
        %731 = vmatprep.subr.mxu0 0.0
        %732 = vmatpush1.msra.mxu0 0.0
        %733 = vmatprep.subr.mxu0 0.0
        %734 = vmatpush1.msra.mxu0 0.0
        %735 = vmatprep.subr.mxu0 0.0
        %736 = vmatpush1.msra.mxu0 0.0
        %737 = vmatprep.mubr.f32.mxu0 0.0
        %738 = vmatmul.mubr.f32.gmra.mrb[0].mxu0 %v482
        %v739 = vpop.f32.mrb[0].mxu0
        %v740 = vadd.f32 0.0, %v739
        %v741 = vpop.f32.mrb[0].mxu0
        %742 = vmatprep.mubr.f32.mxu0 0.0
        %743 = vmatmul.mubr.f32.gmra.mrb[0].mxu0 %v485
        %v744 = vpop.f32.mrb[0].mxu0
        %v745 = vadd.f32 0.0, %v744
        %v746 = vpop.f32.mrb[0].mxu0
        %747 = vmatprep.mubr.f32.mxu0 0.0
        %748 = vmatmul.mubr.f32.gmra.mrb[0].mxu0 %v488
        %v749 = vpop.f32.mrb[0].mxu0
        %v750 = vadd.f32 0.0, %v749
        %v751 = vpop.f32.mrb[0].mxu0
        %752 = vmatprep.mubr.f32.mxu0 0.0
        %753 = vmatmul.mubr.f32.gmra.mrb[0].mxu0 %v491
        %v754 = vpop.f32.mrb[0].mxu0
        %v755 = vadd.f32 0.0, %v754
        %v756 = vpop.f32.mrb[0].mxu0
        %757 = vmatprep.mubr.f32.mxu0 0.0
        %758 = vmatmul.mubr.f32.gmra.mrb[0].mxu0 %v494
        %v759 = vpop.f32.mrb[0].mxu0
        %v760 = vadd.f32 0.0, %v759
        %v761 = vpop.f32.mrb[0].mxu0
        %762 = vmatprep.mubr.f32.mxu0 0.0
        %763 = vmatmul.mubr.f32.gmra.mrb[0].mxu0 %v497
        %v764 = vpop.f32.mrb[0].mxu0
        %v765 = vadd.f32 0.0, %v764
        %v766 = vpop.f32.mrb[0].mxu0
        %767 = vmatprep.mubr.f32.mxu0 0.0
        %768 = vmatmul.mubr.f32.gmra.mrb[0].mxu0 %v500
        %v769 = vpop.f32.mrb[0].mxu0
        %v770 = vadd.f32 0.0, %v769
        %v771 = vpop.f32.mrb[0].mxu0
        %772 = vmatprep.mubr.f32.mxu0 0.0
        %773 = vmatmul.mubr.f32.gmra.mrb[0].mxu0 %v503
        %v774 = vpop.f32.mrb[0].mxu0
        %v775 = vadd.f32 0.0, %v774
        %v776 = vpop.f32.mrb[0].mxu0
        %777 = vmatprep.mubr.f32.mxu0 0.0
        %778 = vmatmul.mubr.f32.gmra.mrb[0].mxu0 %v506
        %v779 = vpop.f32.mrb[0].mxu0
        %v780 = vadd.f32 0.0, %v779
        %v781 = vpop.f32.mrb[0].mxu0
        %782 = vmatprep.mubr.f32.mxu0 0.0
        %783 = vmatmul.mubr.f32.gmra.mrb[0].mxu0 %v509
        %v784 = vpop.f32.mrb[0].mxu0
        %v785 = vadd.f32 0.0, %v784
        %v786 = vpop.f32.mrb[0].mxu0
        %787 = vmatprep.mubr.f32.mxu0 0.0
        %788 = vmatmul.mubr.f32.gmra.mrb[0].mxu0 %v512
        %v789 = vpop.f32.mrb[0].mxu0
        %v790 = vadd.f32 0.0, %v789
        %v791 = vpop.f32.mrb[0].mxu0
        %792 = vmatprep.mubr.f32.mxu0 0.0
        %793 = vmatmul.mubr.f32.gmra.mrb[0].mxu0 %v515
        %v794 = vpop.f32.mrb[0].mxu0
        %v795 = vadd.f32 0.0, %v794
        %v796 = vpop.f32.mrb[0].mxu0
        %797 = vmatprep.mubr.f32.mxu0 0.0
        %798 = vmatmul.mubr.f32.gmra.mrb[0].mxu0 %v518
        %v799 = vpop.f32.mrb[0].mxu0
        %v800 = vadd.f32 0.0, %v799
        %v801 = vpop.f32.mrb[0].mxu0
        %802 = vmatprep.mubr.f32.mxu0 0.0
        %803 = vmatmul.mubr.f32.gmra.mrb[0].mxu0 %v521
        %v804 = vpop.f32.mrb[0].mxu0
        %v805 = vadd.f32 0.0, %v804
        %v806 = vpop.f32.mrb[0].mxu0
        %807 = vmatprep.mubr.f32.mxu0 0.0
        %808 = vmatmul.mubr.f32.gmra.mrb[0].mxu0 %v524
        %v809 = vpop.f32.mrb[0].mxu0
        %v810 = vadd.f32 0.0, %v809
        %v811 = vpop.f32.mrb[0].mxu0
        %812 = vmatprep.mubr.f32.mxu0 0.0
        %813 = vmatmul.mubr.f32.gmra.mrb[0].mxu0 %v527
        %v814 = vpop.f32.mrb[0].mxu0
        %v815 = vadd.f32 0.0, %v814
        %v816 = vpop.f32.mrb[0].mxu0
        %817 = vmatprep.mubr.f32.mxu0 0.0
        %818 = vmatmul.mubr.f32.gmra.mrb[0].mxu0 %v530
        %v819 = vpop.f32.mrb[0].mxu0
        %v820 = vadd.f32 0.0, %v819
        %v821 = vpop.f32.mrb[0].mxu0
        %822 = vmatprep.mubr.f32.mxu0 0.0
        %823 = vmatmul.mubr.f32.gmra.mrb[0].mxu0 %v533
        %v824 = vpop.f32.mrb[0].mxu0
        %v825 = vadd.f32 0.0, %v824
        %v826 = vpop.f32.mrb[0].mxu0
        %827 = vmatprep.mubr.f32.mxu0 0.0
        %828 = vmatmul.mubr.f32.gmra.mrb[0].mxu0 %v536
        %v829 = vpop.f32.mrb[0].mxu0
        %v830 = vadd.f32 0.0, %v829
        %v831 = vpop.f32.mrb[0].mxu0
        %832 = vmatprep.mubr.f32.mxu0 0.0
        %833 = vmatmul.mubr.f32.gmra.mrb[0].mxu0 %v539
        %v834 = vpop.f32.mrb[0].mxu0
        %v835 = vadd.f32 0.0, %v834
        %v836 = vpop.f32.mrb[0].mxu0
        %837 = vmatprep.mubr.f32.mxu0 0.0
        %838 = vmatmul.mubr.f32.gmra.mrb[0].mxu0 %v542
        %v839 = vpop.f32.mrb[0].mxu0
        %v840 = vadd.f32 0.0, %v839
        %v841 = vpop.f32.mrb[0].mxu0
        %842 = vmatprep.mubr.f32.mxu0 0.0
        %843 = vmatmul.mubr.f32.gmra.mrb[0].mxu0 %v545
        %v844 = vpop.f32.mrb[0].mxu0
        %v845 = vadd.f32 0.0, %v844
        %v846 = vpop.f32.mrb[0].mxu0
        %847 = vmatprep.mubr.f32.mxu0 0.0
        %848 = vmatmul.mubr.f32.gmra.mrb[0].mxu0 %v548
        %v849 = vpop.f32.mrb[0].mxu0
        %v850 = vadd.f32 0.0, %v849
        %v851 = vpop.f32.mrb[0].mxu0
        %852 = vmatprep.mubr.f32.mxu0 0.0
        %853 = vmatmul.mubr.f32.gmra.mrb[0].mxu0 %v551
        %v854 = vpop.f32.mrb[0].mxu0
        %v855 = vadd.f32 0.0, %v854
        %v856 = vpop.f32.mrb[0].mxu0
        %857 = vmatprep.mubr.f32.mxu0 0.0
        %858 = vmatmul.mubr.f32.gmra.mrb[0].mxu0 %v554
        %v859 = vpop.f32.mrb[0].mxu0
        %v860 = vadd.f32 0.0, %v859
        %v861 = vpop.f32.mrb[0].mxu0
        %862 = vmatprep.mubr.f32.mxu0 0.0
        %863 = vmatmul.mubr.f32.gmra.mrb[0].mxu0 %v557
        %v864 = vpop.f32.mrb[0].mxu0
        %v865 = vadd.f32 0.0, %v864
        %v866 = vpop.f32.mrb[0].mxu0
        %867 = vmatprep.mubr.f32.mxu0 0.0
        %868 = vmatmul.mubr.f32.gmra.mrb[0].mxu0 %v560
        %v869 = vpop.f32.mrb[0].mxu0
        %v870 = vadd.f32 0.0, %v869
        %v871 = vpop.f32.mrb[0].mxu0
        %872 = vmatprep.mubr.f32.mxu0 0.0
        %873 = vmatmul.mubr.f32.gmra.mrb[0].mxu0 %v563
        %v874 = vpop.f32.mrb[0].mxu0
        %v875 = vadd.f32 0.0, %v874
        %v876 = vpop.f32.mrb[0].mxu0
        %877 = vmatprep.mubr.f32.mxu0 0.0
        %878 = vmatmul.mubr.f32.gmra.mrb[0].mxu0 %v566
        %v879 = vpop.f32.mrb[0].mxu0
        %v880 = vadd.f32 0.0, %v879
        %v881 = vpop.f32.mrb[0].mxu0
        %882 = vmatprep.mubr.f32.mxu0 0.0
        %883 = vmatmul.mubr.f32.gmra.mrb[0].mxu0 %v569
        %v884 = vpop.f32.mrb[0].mxu0
        %v885 = vadd.f32 0.0, %v884
        %v886 = vpop.f32.mrb[0].mxu0
        %887 = vmatprep.mubr.f32.mxu0 0.0
        %888 = vmatmul.mubr.f32.gmra.mrb[0].mxu0 %v572
        %v889 = vpop.f32.mrb[0].mxu0
        %v890 = vadd.f32 0.0, %v889
        %v891 = vpop.f32.mrb[0].mxu0
        %892 = vmatprep.mubr.f32.mxu0 0.0
        %893 = vmatmul.mubr.f32.gmra.mrb[0].mxu0 %v575
        %v894 = vpop.f32.mrb[0].mxu0
        %v895 = vadd.f32 0.0, %v894
        %v896 = vpop.f32.mrb[0].mxu0
        %897 = vmatprep.mubr.f32.mxu0 0.0
        %898 = vmatmul.mubr.f32.gmra.mrb[0].mxu0 %v578
        %v899 = vpop.f32.mrb[0].mxu0
        %v900 = vadd.f32 0.0, %v899
        %v901 = vpop.f32.mrb[0].mxu0
        %902 = vmatprep.mubr.f32.mxu0 0.0
        %903 = vmatmul.mubr.f32.gmra.mrb[0].mxu0 %v581
        %v904 = vpop.f32.mrb[0].mxu0
        %v905 = vadd.f32 0.0, %v904
        %v906 = vpop.f32.mrb[0].mxu0
        %907 = vmatprep.mubr.f32.mxu0 0.0
        %908 = vmatmul.mubr.f32.gmra.mrb[0].mxu0 %v584
        %v909 = vpop.f32.mrb[0].mxu0
        %v910 = vadd.f32 0.0, %v909
        %v911 = vpop.f32.mrb[0].mxu0
        %912 = vmatprep.mubr.f32.mxu0 0.0
        %913 = vmatmul.mubr.f32.gmra.mrb[0].mxu0 %v587
        %v914 = vpop.f32.mrb[0].mxu0
        %v915 = vadd.f32 0.0, %v914
        %v916 = vpop.f32.mrb[0].mxu0
        %917 = vmatprep.mubr.f32.mxu0 0.0
        %918 = vmatmul.mubr.f32.gmra.mrb[0].mxu0 %v590
        %v919 = vpop.f32.mrb[0].mxu0
        %v920 = vadd.f32 0.0, %v919
        %v921 = vpop.f32.mrb[0].mxu0
        %922 = vmatprep.mubr.f32.mxu0 0.0
        %923 = vmatmul.mubr.f32.gmra.mrb[0].mxu0 %v593
        %v924 = vpop.f32.mrb[0].mxu0
        %v925 = vadd.f32 0.0, %v924
        %v926 = vpop.f32.mrb[0].mxu0
        %927 = vmatprep.mubr.f32.mxu0 0.0
        %928 = vmatmul.mubr.f32.gmra.mrb[0].mxu0 %v596
        %v929 = vpop.f32.mrb[0].mxu0
        %v930 = vadd.f32 0.0, %v929
        %v931 = vpop.f32.mrb[0].mxu0
        %932 = vmatprep.mubr.f32.mxu0 0.0
        %933 = vmatmul.mubr.f32.gmra.mrb[0].mxu0 %v599
        %v934 = vpop.f32.mrb[0].mxu0
        %v935 = vadd.f32 0.0, %v934
        %v936 = vpop.f32.mrb[0].mxu0
        %937 = vmatprep.mubr.f32.mxu0 0.0
        %938 = vmatmul.mubr.f32.gmra.mrb[0].mxu0 %v602
        %v939 = vpop.f32.mrb[0].mxu0
        %v940 = vadd.f32 0.0, %v939
        %v941 = vpop.f32.mrb[0].mxu0
        %942 = vmatprep.mubr.f32.mxu0 0.0
        %943 = vmatmul.mubr.f32.gmra.mrb[0].mxu0 %v605
        %v944 = vpop.f32.mrb[0].mxu0
        %v945 = vadd.f32 0.0, %v944
        %v946 = vpop.f32.mrb[0].mxu0
        %947 = vmatprep.mubr.f32.mxu0 0.0
        %948 = vmatmul.mubr.f32.gmra.mrb[0].mxu0 %v608
        %v949 = vpop.f32.mrb[0].mxu0
        %v950 = vadd.f32 0.0, %v949
        %v951 = vpop.f32.mrb[0].mxu0
        %952 = vmatprep.mubr.f32.mxu0 0.0
        %953 = vmatmul.mubr.f32.gmra.mrb[0].mxu0 %v611
        %v954 = vpop.f32.mrb[0].mxu0
        %v955 = vadd.f32 0.0, %v954
        %v956 = vpop.f32.mrb[0].mxu0
        %957 = vmatprep.mubr.f32.mxu0 0.0
        %958 = vmatmul.mubr.f32.gmra.mrb[0].mxu0 %v614
        %v959 = vpop.f32.mrb[0].mxu0
        %v960 = vadd.f32 0.0, %v959
        %v961 = vpop.f32.mrb[0].mxu0
        %962 = vmatprep.mubr.f32.mxu0 0.0
        %963 = vmatmul.mubr.f32.gmra.mrb[0].mxu0 %v617
        %v964 = vpop.f32.mrb[0].mxu0
        %v965 = vadd.f32 0.0, %v964
        %v966 = vpop.f32.mrb[0].mxu0
        %967 = vmatprep.mubr.f32.mxu0 0.0
        %968 = vmatmul.mubr.f32.gmra.mrb[0].mxu0 %v620
        %v969 = vpop.f32.mrb[0].mxu0
        %v970 = vadd.f32 0.0, %v969
        %v971 = vpop.f32.mrb[0].mxu0
        %972 = vmatprep.mubr.f32.mxu0 0.0
        %973 = vmatmul.mubr.f32.gmra.mrb[0].mxu0 %v623
        %v974 = vpop.f32.mrb[0].mxu0
        %v975 = vadd.f32 0.0, %v974
        %v976 = vpop.f32.mrb[0].mxu0
        %977 = vmatprep.mubr.f32.mxu0 0.0
        %978 = vmatmul.mubr.f32.gmra.mrb[0].mxu0 %v626
        %v979 = vpop.f32.mrb[0].mxu0
        %v980 = vadd.f32 0.0, %v979
        %v981 = vpop.f32.mrb[0].mxu0
        %982 = vmatprep.mubr.f32.mxu0 0.0
        %983 = vmatmul.mubr.f32.gmra.mrb[0].mxu0 %v629
        %v984 = vpop.f32.mrb[0].mxu0
        %v985 = vadd.f32 0.0, %v984
        %v986 = vpop.f32.mrb[0].mxu0
        %987 = vmatprep.mubr.f32.mxu0 0.0
        %988 = vmatmul.mubr.f32.gmra.mrb[0].mxu0 %v632
        %v989 = vpop.f32.mrb[0].mxu0
        %v990 = vadd.f32 0.0, %v989
        %v991 = vpop.f32.mrb[0].mxu0
        %992 = vmatprep.mubr.f32.mxu0 0.0
        %993 = vmatmul.mubr.f32.gmra.mrb[0].mxu0 %v635
        %v994 = vpop.f32.mrb[0].mxu0
        %v995 = vadd.f32 0.0, %v994
        %v996 = vpop.f32.mrb[0].mxu0
        %997 = vmatprep.mubr.f32.mxu0 0.0
        %998 = vmatmul.mubr.f32.gmra.mrb[0].mxu0 %v638
        %v999 = vpop.f32.mrb[0].mxu0
        %v1000 = vadd.f32 0.0, %v999
        %v1001 = vpop.f32.mrb[0].mxu0
        %1002 = vmatprep.mubr.f32.mxu0 0.0
        %1003 = vmatmul.mubr.f32.gmra.mrb[0].mxu0 %v641
        %v1004 = vpop.f32.mrb[0].mxu0
        %v1005 = vadd.f32 0.0, %v1004
        %v1006 = vpop.f32.mrb[0].mxu0
        %1007 = vmatprep.mubr.f32.mxu0 0.0
        %1008 = vmatmul.mubr.f32.gmra.mrb[0].mxu0 %v644
        %v1009 = vpop.f32.mrb[0].mxu0
        %v1010 = vadd.f32 0.0, %v1009
        %v1011 = vpop.f32.mrb[0].mxu0
        %1012 = vmatprep.mubr.f32.mxu0 0.0
        %1013 = vmatmul.mubr.f32.gmra.mrb[0].mxu0 %v647
        %v1014 = vpop.f32.mrb[0].mxu0
        %v1015 = vadd.f32 0.0, %v1014
        %v1016 = vpop.f32.mrb[0].mxu0
        %1017 = vmatprep.mubr.f32.mxu0 0.0
        %1018 = vmatmul.mubr.f32.gmra.mrb[0].mxu0 %v650
        %v1019 = vpop.f32.mrb[0].mxu0
        %v1020 = vadd.f32 0.0, %v1019
        %v1021 = vpop.f32.mrb[0].mxu0
        %1022 = vmatprep.mubr.f32.mxu0 0.0
        %1023 = vmatmul.mubr.f32.gmra.mrb[0].mxu0 %v653
        %v1024 = vpop.f32.mrb[0].mxu0
        %v1025 = vadd.f32 0.0, %v1024
        %v1026 = vpop.f32.mrb[0].mxu0
        %1027 = vmatprep.mubr.f32.mxu0 0.0
        %1028 = vmatmul.mubr.f32.gmra.mrb[0].mxu0 %v656
        %v1029 = vpop.f32.mrb[0].mxu0
        %v1030 = vadd.f32 0.0, %v1029
        %v1031 = vpop.f32.mrb[0].mxu0
        %1032 = vmatprep.mubr.f32.mxu0 0.0
        %1033 = vmatmul.mubr.f32.gmra.mrb[0].mxu0 %v659
        %v1034 = vpop.f32.mrb[0].mxu0
        %v1035 = vadd.f32 0.0, %v1034
        %v1036 = vpop.f32.mrb[0].mxu0
        %1037 = vmatprep.mubr.f32.mxu0 0.0
        %1038 = vmatmul.mubr.f32.gmra.mrb[0].mxu0 %v662
        %v1039 = vpop.f32.mrb[0].mxu0
        %v1040 = vadd.f32 0.0, %v1039
        %v1041 = vpop.f32.mrb[0].mxu0
        %1042 = vmatprep.mubr.f32.mxu0 0.0
        %1043 = vmatmul.mubr.f32.gmra.mrb[0].mxu0 %v665
        %v1044 = vpop.f32.mrb[0].mxu0
        %v1045 = vadd.f32 0.0, %v1044
        %v1046 = vpop.f32.mrb[0].mxu0
        %1047 = vmatprep.mubr.f32.mxu0 0.0
        %1048 = vmatmul.mubr.f32.gmra.mrb[0].mxu0 %v668
        %v1049 = vpop.f32.mrb[0].mxu0
        %v1050 = vadd.f32 0.0, %v1049
        %v1051 = vpop.f32.mrb[0].mxu0
        %1052 = vmatprep.mubr.f32.mxu0 0.0
        %1053 = vmatmul.mubr.f32.gmra.mrb[0].mxu0 %v671
        %v1054 = vpop.f32.mrb[0].mxu0
        %v1055 = vadd.f32 0.0, %v1054
        %v1056 = vpop.f32.mrb[0].mxu0
        %1057 = vdwg.mxu0
        %1058 = vxpose.xlu0.b32.start [1/16] %v740, 128
        %1059 = vxpose.xlu0.b32.cont [2/16] %v745, 128
        %1060 = vxpose.xlu0.b32.cont [3/16] %v750, 128
        %1061 = vxpose.xlu0.b32.cont [4/16] %v755, 128
        %1062 = vxpose.xlu0.b32.cont [5/16] %v760, 128
        %1063 = vxpose.xlu0.b32.cont [6/16] %v765, 128
        %1064 = vxpose.xlu0.b32.cont [7/16] %v770, 128
        %1065 = vxpose.xlu0.b32.cont [8/16] %v775, 128
        %1066 = vxpose.xlu0.b32.cont [9/16] %v780, 128
        %1067 = vxpose.xlu0.b32.cont [10/16] %v785, 128
        %1068 = vxpose.xlu0.b32.cont [11/16] %v790, 128
        %1069 = vxpose.xlu0.b32.cont [12/16] %v795, 128
        %1070 = vxpose.xlu0.b32.cont [13/16] %v800, 128
        %1071 = vxpose.xlu0.b32.cont [14/16] %v805, 128
        %1072 = vxpose.xlu0.b32.cont [15/16] %v810, 128
        %1073 = vxpose.xlu0.b32.end [16/16] %v815, 128
        %v1074 = vpop.trf.xlu0
        %v1075 = vpop.trf.xlu0
        %v1076 = vpop.trf.xlu0
        %v1077 = vpop.trf.xlu0
        %v1078 = vpop.trf.xlu0
        %v1079 = vpop.trf.xlu0
        %v1080 = vpop.trf.xlu0
        %v1081 = vpop.trf.xlu0
        %v1082 = vpop.trf.xlu0
        %v1083 = vpop.trf.xlu0
        %v1084 = vpop.trf.xlu0
        %v1085 = vpop.trf.xlu0
        %v1086 = vpop.trf.xlu0
        %v1087 = vpop.trf.xlu0
        %v1088 = vpop.trf.xlu0
        %v1089 = vpop.trf.xlu0
        %1090 = vxpose.xlu0.b32.start [1/16] %v820, 128
        %1091 = vxpose.xlu0.b32.cont [2/16] %v825, 128
        %1092 = vxpose.xlu0.b32.cont [3/16] %v830, 128
        %1093 = vxpose.xlu0.b32.cont [4/16] %v835, 128
        %1094 = vxpose.xlu0.b32.cont [5/16] %v840, 128
        %1095 = vxpose.xlu0.b32.cont [6/16] %v845, 128
        %1096 = vxpose.xlu0.b32.cont [7/16] %v850, 128
        %1097 = vxpose.xlu0.b32.cont [8/16] %v855, 128
        %1098 = vxpose.xlu0.b32.cont [9/16] %v860, 128
        %1099 = vxpose.xlu0.b32.cont [10/16] %v865, 128
        %1100 = vxpose.xlu0.b32.cont [11/16] %v870, 128
        %1101 = vxpose.xlu0.b32.cont [12/16] %v875, 128
        %1102 = vxpose.xlu0.b32.cont [13/16] %v880, 128
        %1103 = vxpose.xlu0.b32.cont [14/16] %v885, 128
        %1104 = vxpose.xlu0.b32.cont [15/16] %v890, 128
        %1105 = vxpose.xlu0.b32.end [16/16] %v895, 128
        %v1106 = vpop.trf.xlu0
        %v1107 = vpop.trf.xlu0
        %v1108 = vpop.trf.xlu0
        %v1109 = vpop.trf.xlu0
        %v1110 = vpop.trf.xlu0
        %v1111 = vpop.trf.xlu0
        %v1112 = vpop.trf.xlu0
        %v1113 = vpop.trf.xlu0
        %v1114 = vpop.trf.xlu0
        %v1115 = vpop.trf.xlu0
        %v1116 = vpop.trf.xlu0
        %v1117 = vpop.trf.xlu0
        %v1118 = vpop.trf.xlu0
        %v1119 = vpop.trf.xlu0
        %v1120 = vpop.trf.xlu0
        %v1121 = vpop.trf.xlu0
        %1122 = vxpose.xlu0.b32.start [1/16] %v900, 128
        %1123 = vxpose.xlu0.b32.cont [2/16] %v905, 128
        %1124 = vxpose.xlu0.b32.cont [3/16] %v910, 128
        %1125 = vxpose.xlu0.b32.cont [4/16] %v915, 128
        %1126 = vxpose.xlu0.b32.cont [5/16] %v920, 128
        %1127 = vxpose.xlu0.b32.cont [6/16] %v925, 128
        %1128 = vxpose.xlu0.b32.cont [7/16] %v930, 128
        %1129 = vxpose.xlu0.b32.cont [8/16] %v935, 128
        %1130 = vxpose.xlu0.b32.cont [9/16] %v940, 128
        %1131 = vxpose.xlu0.b32.cont [10/16] %v945, 128
        %1132 = vxpose.xlu0.b32.cont [11/16] %v950, 128
        %1133 = vxpose.xlu0.b32.cont [12/16] %v955, 128
        %1134 = vxpose.xlu0.b32.cont [13/16] %v960, 128
        %1135 = vxpose.xlu0.b32.cont [14/16] %v965, 128
        %1136 = vxpose.xlu0.b32.cont [15/16] %v970, 128
        %1137 = vxpose.xlu0.b32.end [16/16] %v975, 128
        %v1138 = vpop.trf.xlu0
        %v1139 = vpop.trf.xlu0
        %v1140 = vpop.trf.xlu0
        %v1141 = vpop.trf.xlu0
        %v1142 = vpop.trf.xlu0
        %v1143 = vpop.trf.xlu0
        %v1144 = vpop.trf.xlu0
        %v1145 = vpop.trf.xlu0
        %v1146 = vpop.trf.xlu0
        %v1147 = vpop.trf.xlu0
        %v1148 = vpop.trf.xlu0
        %v1149 = vpop.trf.xlu0
        %v1150 = vpop.trf.xlu0
        %v1151 = vpop.trf.xlu0
        %v1152 = vpop.trf.xlu0
        %v1153 = vpop.trf.xlu0
        %1154 = vxpose.xlu0.b32.start [1/16] %v980, 128
        %1155 = vxpose.xlu0.b32.cont [2/16] %v985, 128
        %1156 = vxpose.xlu0.b32.cont [3/16] %v990, 128
        %1157 = vxpose.xlu0.b32.cont [4/16] %v995, 128
        %1158 = vxpose.xlu0.b32.cont [5/16] %v1000, 128
        %1159 = vxpose.xlu0.b32.cont [6/16] %v1005, 128
        %1160 = vxpose.xlu0.b32.cont [7/16] %v1010, 128
        %1161 = vxpose.xlu0.b32.cont [8/16] %v1015, 128
        %1162 = vxpose.xlu0.b32.cont [9/16] %v1020, 128
        %1163 = vxpose.xlu0.b32.cont [10/16] %v1025, 128
        %1164 = vxpose.xlu0.b32.cont [11/16] %v1030, 128
        %1165 = vxpose.xlu0.b32.cont [12/16] %v1035, 128
        %1166 = vxpose.xlu0.b32.cont [13/16] %v1040, 128
        %1167 = vxpose.xlu0.b32.cont [14/16] %v1045, 128
        %1168 = vxpose.xlu0.b32.cont [15/16] %v1050, 128
        %1169 = vxpose.xlu0.b32.end [16/16] %v1055, 128
        %v1170 = vpop.trf.xlu0
        %v1171 = vpop.trf.xlu0
        %v1172 = vpop.trf.xlu0
        %v1173 = vpop.trf.xlu0
        %v1174 = vpop.trf.xlu0
        %v1175 = vpop.trf.xlu0
        %v1176 = vpop.trf.xlu0
        %v1177 = vpop.trf.xlu0
        %v1178 = vpop.trf.xlu0
        %v1179 = vpop.trf.xlu0
        %v1180 = vpop.trf.xlu0
        %v1181 = vpop.trf.xlu0
        %v1182 = vpop.trf.xlu0
        %v1183 = vpop.trf.xlu0
        %v1184 = vpop.trf.xlu0
        %v1185 = vpop.trf.xlu0
        %1186 = vst [vmem:[%s218] sm:$0xff] %v1074
        %1187 = vst [vmem:[%s218 + $0x8] sm:$0xff] %v1075
        %1188 = vst [vmem:[%s218 + $0x10] sm:$0xff] %v1076
        %1189 = vst [vmem:[%s218 + $0x18] sm:$0xff] %v1077
        %1190 = vst [vmem:[%s218 + $0x20] sm:$0xff] %v1078
        %1191 = vst [vmem:[%s218 + $0x28] sm:$0xff] %v1079
        %1192 = vst [vmem:[%s218 + $0x30] sm:$0xff] %v1080
        %1193 = vst [vmem:[%s218 + $0x38] sm:$0xff] %v1081
        %1194 = vst [vmem:[%s218 + $0x40] sm:$0xff] %v1106
        %1195 = vst [vmem:[%s218 + $0x48] sm:$0xff] %v1107
        %1196 = vst [vmem:[%s218 + $0x50] sm:$0xff] %v1108
        %1197 = vst [vmem:[%s218 + $0x58] sm:$0xff] %v1109
        %1198 = vst [vmem:[%s218 + $0x60] sm:$0xff] %v1110
        %1199 = vst [vmem:[%s218 + $0x68] sm:$0xff] %v1111
        %1200 = vst [vmem:[%s218 + $0x70] sm:$0xff] %v1112
        %1201 = vst [vmem:[%s218 + $0x78] sm:$0xff] %v1113
        %1202 = vst [vmem:[%s218 + $0x80] sm:$0xff] %v1138
        %1203 = vst [vmem:[%s218 + $0x88] sm:$0xff] %v1139
        %1204 = vst [vmem:[%s218 + $0x90] sm:$0xff] %v1140
        %1205 = vst [vmem:[%s218 + $0x98] sm:$0xff] %v1141
        %1206 = vst [vmem:[%s218 + $0xa0] sm:$0xff] %v1142
        %1207 = vst [vmem:[%s218 + $0xa8] sm:$0xff] %v1143
        %1208 = vst [vmem:[%s218 + $0xb0] sm:$0xff] %v1144
        %1209 = vst [vmem:[%s218 + $0xb8] sm:$0xff] %v1145
        %1210 = vst [vmem:[%s218 + $0xc0] sm:$0xff] %v1170
        %1211 = vst [vmem:[%s218 + $0xc8] sm:$0xff] %v1171
        %1212 = vst [vmem:[%s218 + $0xd0] sm:$0xff] %v1172
        %1213 = vst [vmem:[%s218 + $0xd8] sm:$0xff] %v1173
        %1214 = vst [vmem:[%s218 + $0xe0] sm:$0xff] %v1174
        %1215 = vst [vmem:[%s218 + $0xe8] sm:$0xff] %v1175
        %1216 = vst [vmem:[%s218 + $0xf0] sm:$0xff] %v1176
        %1217 = vst [vmem:[%s218 + $0xf8] sm:$0xff] %v1177
        %s1218 = sand.u32 %s97, 1
        %s1219 = scalar_lea.sflag [#allocation4], %s1218
        %s1220 = sand.u32 %s97, 1
        %s1221 = smul.addr %s1220, 256
        %s1222 = scalar_lea.vmem [#allocation8], %s1221
        // Predicated region
        $region45: #{tpu_custom_call.1} parent=31 // pred_check
          %p1223 = pneg %p107
        $region46: #{tpu_custom_call.1} parent=31 // pred_check_branch
          %1225 = sbr.rel (%p1223) target = $region48
        $region47: #{tpu_custom_call.1} parent=31 // pred_region
          %s1226 = smul.u32 4, %s21
          %s1228 = ssub.s32 4096, 4096
          %1229 = vsyncadd %s1219, %s1228
          %s1230 = smul.addr %s1226, 8
          %s1231 = smul.addr %s1230, 128
          %s1232 = scalar_lea.hbm %s3, %s1231
          %s1233 = sshll.u32 %s1222, 4
          %s1234 = int_to_ptr.vmem [resolvable:$true] %s1233
          %1239 = dma.vmem_to_hbm [thread:$0]  %s1234, 4096, %s1232, %s1219, 128, 128, 8
        $region48: #{tpu_custom_call.1} parent=31 // pred_fallthru
          _
      $region32: #{tpu_custom_call.1} parent=5 // pred_fallthru
        _
      %p1240 = scmp.le.s32.totalorder 2, %s16
      // Predicated region
      $region49: #{tpu_custom_call.1} parent=5 // pred_check
        %p1241 = pneg %p1240
      $region50: #{tpu_custom_call.1} parent=5 // pred_check_branch
        %1243 = sbr.rel (%p1241) target = $region52
      $region51: #{tpu_custom_call.1} parent=5 // pred_region
        %s1244 = ssub.s32 %s16, 2
        // Predicated region
        $region53: #{tpu_custom_call.1} parent=51 // pred_check
          %p1245 = pneg %p113
        $region54: #{tpu_custom_call.1} parent=51 // pred_check_branch
          %1247 = sbr.rel (%p1245) target = $region56
        $region55: #{tpu_custom_call.1} parent=51 // pred_region
          %s1248 = sand.u32 %s98, 1
          %s1249 = scalar_lea.sflag [#allocation4], %s1248
          %s1250 = sand.u32 %s98, 1
          %s1251 = smul.addr %s1250, 256
          %s1252 = scalar_lea.vmem [#allocation8], %s1251
          %1253 = dma.done %s1249, 4096
        $region56: #{tpu_custom_call.1} parent=51 // pred_fallthru
          _
      $region52: #{tpu_custom_call.1} parent=5 // pred_fallthru
        _
    $region6: #{tpu_custom_call.1} parent=1 // loop_footer
      %s20 = sadd.s32 1, %s16
    $region7: #{tpu_custom_call.1} parent=1 // loop_footer_branch
      %15 = sbr.rel target = $region3
    $region8: #{tpu_custom_call.1} parent=1 // loop_exit
      _
    %1254 = vsyncpa [#allocation3], 1
    %s1255 = scalar_lea.sflag [#allocation3], 1
    %1256 = vsyncpa %s1255, 1
    %1257 = vsyncpa [#allocation6], 1
    %1258 = vsyncpa [#allocation4], 1
    %s1259 = scalar_lea.sflag [#allocation4], 1
    %1260 = vsyncpa %s1259, 1

</llo_original>
